<compile_context>
chip_gen: v7x
topology: tpu7x:2x2x1
jax: 0.10.0
libtpu: 0.0.40
codegen_flags: <defaults>
</compile_context>

<pallas_src>
import functools

import jax
import jax.numpy as jnp
from jax import lax
from jax.experimental import pallas as pl
from jax.experimental.pallas import tpu as pltpu


# ----------------------------- Pallas kernel -------------------------------- #

def _attention_kernel(xq_ref, xkv_ref, wq_ref, bq_ref, wk_ref, bk_ref,
                      wv_ref, bv_ref, mask_ref, wproj_ref, bproj_ref,
                      o_ref, a_ref,
                      acc_ref, kcache_ref, vcache_ref,
                      *, num_heads, scale):
    """One (batch, q-tile, head) step.

    xq_ref:   (1, tq, C)   xkv_ref: (1, N, C)
    wq/wk/wv: (1, C, D)    bq/bk/bv: (1, 1, D)
    mask_ref: (1, 1, tq, N)
    wproj_ref:(1, D, C)    bproj_ref:(1, C)
    o_ref:    (1, tq, C)   a_ref:   (1, 1, tq, N)
    acc_ref:  (tq, C) f32  kcache/vcache: (H, N, D) scratch
    """
    qi = pl.program_id(1)
    h = pl.program_id(2)

    xq = xq_ref[0]                                            # (tq, C)
    cdt = xq.dtype                                            # MXU operand dtype

    # ---- k / v projection for this head: once per (batch, head), cached ----
    @pl.when(qi == 0)
    def _():
        xkv = xkv_ref[0]                                      # (N, C)
        k = (jnp.dot(xkv, wk_ref[0], preferred_element_type=jnp.float32)
             + bk_ref[0].astype(jnp.float32))                 # (N, D) f32
        v = (jnp.dot(xkv, wv_ref[0], preferred_element_type=jnp.float32)
             + bv_ref[0].astype(jnp.float32))                 # (N, D) f32
        kcache_ref[h] = k.astype(kcache_ref.dtype)
        vcache_ref[h] = v.astype(vcache_ref.dtype)

    kh = kcache_ref[h]                                        # (N, D)
    vh = vcache_ref[h]                                        # (N, D)

    # ---- q projection for this (q-tile, head); softmax scale folded into q --
    q = (jnp.dot(xq, wq_ref[0], preferred_element_type=jnp.float32)
         + bq_ref[0].astype(jnp.float32)) * scale             # (tq, D) f32
    qc = q.astype(cdt)

    # ---- logits (q @ k^T without materializing k.T) + stable softmax --------
    s = lax.dot_general(qc, kh, (((1,), (1,)), ((), ())),
                        preferred_element_type=jnp.float32)   # (tq, N) f32
    s = s + mask_ref[0, 0].astype(jnp.float32)
    s = s - jnp.max(s, axis=-1, keepdims=True)
    e = jnp.exp(s)
    denom = jnp.sum(e, axis=-1, keepdims=True)                # (tq, 1)
    inv = pl.reciprocal(denom, approx=True)
    inv = inv * (2.0 - denom * inv)        # one Newton step -> rows sum to ~1
    p = e * inv                                               # (tq, N) f32

    a_ref[0, 0] = p.astype(a_ref.dtype)

    # ---- per-head context + accumulated output projection -------------------
    ctx = jnp.dot(p.astype(cdt), vh, preferred_element_type=jnp.float32)
    contrib = jnp.dot(ctx.astype(cdt), wproj_ref[0],
                      preferred_element_type=jnp.float32)     # (tq, C) f32

    @pl.when(h == 0)
    def _():
        acc_ref[...] = contrib + bproj_ref[...].astype(jnp.float32)

    @pl.when(h > 0)
    def _():
        acc_ref[...] = acc_ref[...] + contrib

    @pl.when(h == num_heads - 1)
    def _():
        o_ref[0] = acc_ref[...].astype(o_ref.dtype)           # lane-dense store


# ------------------------------ JAX wrapper --------------------------------- #

def _pick_q_tile(n, max_tile):
    """Largest multiple-of-8 divisor of n that is <= max_tile (or n itself)."""
    if n <= max_tile:
        return n
    for t in range(min(max_tile, n), 7, -1):
        if n % t == 0 and t % 8 == 0:
            return t
    return n


def attention_forward(x, mask, params, num_heads, *, max_q_tile=512):
    """Reproduces Attention.forward(x, mask) -> (x_out, attn).

    attn_drop / proj_drop have p=0.0 in the module -> identity (eval).
    Weight layout: (in_features, out_features), i.e. y = x @ W + b.
    """
    B, N, C = x.shape
    H = num_heads
    assert C % H == 0, "C must equal num_heads * head_dim"
    D = C // H
    scale = D ** (-0.5)

    tq = _pick_q_tile(N, max_q_tile)
    nq = N // tq

    w_qkv = params["w_qkv"]                  # (C, 3C)
    b_qkv = params["b_qkv"]                  # (3C,)
    w_proj = params["w_proj"]                # (C, C)
    b_proj = params["b_proj"]                # (C,)

    # One-time per-head weight layouts (keeps every kernel slice lane-aligned).
    def per_head(w):                         # (C, C) -> (H, C, D)
        return jnp.transpose(w.reshape(C, H, D), (1, 0, 2))

    w_q = per_head(w_qkv[:, :C])
    w_k = per_head(w_qkv[:, C:2 * C])
    w_v = per_head(w_qkv[:, 2 * C:])
    b_q = b_qkv[:C].reshape(H, 1, D)
    b_k = b_qkv[C:2 * C].reshape(H, 1, D)
    b_v = b_qkv[2 * C:].reshape(H, 1, D)
    w_p = w_proj.reshape(H, D, C)
    b_p = b_proj.reshape(1, C)

    # Rough per-step VMEM budget (double-buffered blocks + scratch + live f32).
    itemsize = x.dtype.itemsize
    est = itemsize * (2 * tq * C + 2 * N * C + 6 * C * D + 6 * D
                      + 2 * tq * N + 2 * D * C + 2 * C
                      + 2 * tq * C + 2 * tq * N
                      + 2 * H * N * D)
    est += 4 * (tq * C + 3 * tq * N)
    vmem_limit = int(min(max(2 * est, 32 * 1024 * 1024), 64 * 1024 * 1024))

    kernel = functools.partial(_attention_kernel, num_heads=H, scale=scale)

    out, attn = pl.pallas_call(
        kernel,
        out_shape=(
            jax.ShapeDtypeStruct((B, N, C), x.dtype),
            jax.ShapeDtypeStruct((B, H, N, N), x.dtype),
        ),
        grid=(B, nq, H),
        in_specs=[
            pl.BlockSpec((1, tq, C), lambda b, q, h: (b, q, 0)),        # x (q rows)
            pl.BlockSpec((1, N, C), lambda b, q, h: (b, 0, 0)),         # x (kv rows)
            pl.BlockSpec((1, C, D), lambda b, q, h: (h, 0, 0)),         # w_q
            pl.BlockSpec((1, 1, D), lambda b, q, h: (h, 0, 0)),         # b_q
            pl.BlockSpec((1, C, D), lambda b, q, h: (h, 0, 0)),         # w_k
            pl.BlockSpec((1, 1, D), lambda b, q, h: (h, 0, 0)),         # b_k
            pl.BlockSpec((1, C, D), lambda b, q, h: (h, 0, 0)),         # w_v
            pl.BlockSpec((1, 1, D), lambda b, q, h: (h, 0, 0)),         # b_v
            pl.BlockSpec((1, 1, tq, N), lambda b, q, h: (b, h, q, 0)),  # mask
            pl.BlockSpec((1, D, C), lambda b, q, h: (h, 0, 0)),         # w_proj
            pl.BlockSpec((1, C), lambda b, q, h: (0, 0)),               # b_proj
        ],
        out_specs=(
            pl.BlockSpec((1, tq, C), lambda b, q, h: (b, q, 0)),        # out
            pl.BlockSpec((1, 1, tq, N), lambda b, q, h: (b, h, q, 0)),  # attn
        ),
        scratch_shapes=[
            pltpu.VMEM((tq, C), jnp.float32),   # output-projection accumulator
            pltpu.VMEM((H, N, D), x.dtype),     # per-head k cache
            pltpu.VMEM((H, N, D), x.dtype),     # per-head v cache
        ],
        compiler_params=pltpu.CompilerParams(
            dimension_semantics=("parallel", "arbitrary", "arbitrary"),
            vmem_limit_bytes=vmem_limit),
    )(x, x, w_q, b_q, w_k, b_k, w_v, b_v, mask, w_p, b_p)
    return out, attn


# ----------------------------- reference (jnp) ------------------------------ #

def reference_forward(x, mask, params, num_heads):
    B, N, C = x.shape
    head_dim = C // num_heads
    scale = head_dim ** (-0.5)
    qkv = x @ params["w_qkv"] + params["b_qkv"]
    qkv = qkv.reshape(B, N, 3, num_heads, head_dim).transpose(2, 0, 3, 1, 4)
    q, k, v = qkv[0], qkv[1], qkv[2]
    attn = jnp.einsum("bhnd,bhmd->bhnm", q, k) * scale + mask
    attn = jax.nn.softmax(attn, axis=-1)
    out = jnp.einsum("bhnm,bhmd->bhnd", attn, v)
    out = out.transpose(0, 2, 1, 3).reshape(B, N, C)
    out = out @ params["w_proj"] + params["b_proj"]
    return out, attn


# ---------------------------------- main ------------------------------------ #

if __name__ == "__main__":
    B, N, C = 2, 8, 32
    num_heads = 4

    key = jax.random.PRNGKey(0)
    k_x, k_m, k_wq, k_wp, k_bp = jax.random.split(key, 5)

    x = jax.random.normal(k_x, (B, N, C), dtype=jnp.float32)
    mask = jax.random.normal(k_m, (B, num_heads, N, N), dtype=jnp.float32) * 0.1

    # deterministic synthetic parameters (shapes from nn.Linear in __init__)
    params = {
        "w_qkv": jax.random.normal(k_wq, (C, 3 * C), dtype=jnp.float32) * 0.05,
        "b_qkv": jnp.zeros((3 * C,), dtype=jnp.float32),       # qkv_bias=False
        "w_proj": jax.random.normal(k_wp, (C, C), dtype=jnp.float32) * 0.05,
        "b_proj": jax.random.normal(k_bp, (C,), dtype=jnp.float32) * 0.05,
    }

    out, attn = attention_forward(x, mask, params, num_heads)
    out = jax.block_until_ready(out)
    attn = jax.block_until_ready(attn)

    ref_out, ref_attn = reference_forward(x, mask, params, num_heads)
    assert out.shape == (B, N, C) and attn.shape == (B, num_heads, N, N)
    assert jnp.allclose(attn, ref_attn, atol=1e-3, rtol=1e-3)
    assert jnp.allclose(out, ref_out, atol=2e-3, rtol=2e-3)

    print("KERNEL_OK")
</pallas_src>

<mosaic_0001>
module attributes {stable_mosaic.version = 11 : i64} {
  func.func @_attention_kernel(%arg0: i32, %arg1: i32, %arg2: i32, %arg3: memref<1x8x32xf32, #tpu.memory_space<vmem>>, %arg4: memref<1x8x32xf32, #tpu.memory_space<vmem>>, %arg5: memref<1x32x8xf32, #tpu.memory_space<vmem>>, %arg6: memref<1x1x8xf32, #tpu.memory_space<vmem>>, %arg7: memref<1x32x8xf32, #tpu.memory_space<vmem>>, %arg8: memref<1x1x8xf32, #tpu.memory_space<vmem>>, %arg9: memref<1x32x8xf32, #tpu.memory_space<vmem>>, %arg10: memref<1x1x8xf32, #tpu.memory_space<vmem>>, %arg11: memref<1x1x8x8xf32, #tpu.memory_space<vmem>>, %arg12: memref<1x8x32xf32, #tpu.memory_space<vmem>>, %arg13: memref<1x32xf32, #tpu.memory_space<vmem>>, %arg14: memref<1x8x32xf32, #tpu.memory_space<vmem>>, %arg15: memref<1x1x8x8xf32, #tpu.memory_space<vmem>>, %arg16: memref<8x32xf32, #tpu.memory_space<vmem>>, %arg17: memref<4x8x8xf32, #tpu.memory_space<vmem>>, %arg18: memref<4x8x8xf32, #tpu.memory_space<vmem>>) attributes {dimension_semantics = [#tpu.dimension_semantics<parallel>, #tpu.dimension_semantics<arbitrary>, #tpu.dimension_semantics<arbitrary>], iteration_bounds = array<i64: 2, 1, 4>, scalar_prefetch = 0 : i64, scratch_operands = 3 : i64, tpu.core_type = #tpu.core_type<tc>, window_params = [{transform_indices = @transform_0, window_bounds = array<i64: 1, 8, 32>}, {transform_indices = @transform_1, window_bounds = array<i64: 1, 8, 32>}, {transform_indices = @transform_2, window_bounds = array<i64: 1, 32, 8>}, {transform_indices = @transform_3, window_bounds = array<i64: 1, 1, 8>}, {transform_indices = @transform_4, window_bounds = array<i64: 1, 32, 8>}, {transform_indices = @transform_5, window_bounds = array<i64: 1, 1, 8>}, {transform_indices = @transform_6, window_bounds = array<i64: 1, 32, 8>}, {transform_indices = @transform_7, window_bounds = array<i64: 1, 1, 8>}, {transform_indices = @transform_8, window_bounds = array<i64: 1, 1, 8, 8>}, {transform_indices = @transform_9, window_bounds = array<i64: 1, 8, 32>}, {pipeline_mode = #tpu.pipeline_mode<synchronous>, transform_indices = @transform_10, window_bounds = array<i64: 1, 32>}, {transform_indices = @transform_11, window_bounds = array<i64: 1, 8, 32>}, {transform_indices = @transform_12, window_bounds = array<i64: 1, 1, 8, 8>}]} {
    %c0 = arith.constant 0 : index
    %c0_0 = arith.constant 0 : index
    %c0_1 = arith.constant 0 : index
    %0 = vector.load %arg3[%c0, %c0_0, %c0_1] : memref<1x8x32xf32, #tpu.memory_space<vmem>>, vector<1x8x32xf32>
    %1 = vector.shape_cast %0 : vector<1x8x32xf32> to vector<8x32xf32>
    %c0_i32 = arith.constant 0 : i32
    %2 = arith.cmpi eq, %arg1, %c0_i32 : i32
    %3 = arith.extui %2 : i1 to i32
    %c0_i32_2 = arith.constant 0 : i32
    %4 = arith.cmpi ne, %3, %c0_i32_2 : i32
    scf.if %4 {
      %c0_36 = arith.constant 0 : index
      %c0_37 = arith.constant 0 : index
      %c0_38 = arith.constant 0 : index
      %54 = vector.load %arg4[%c0_36, %c0_37, %c0_38] : memref<1x8x32xf32, #tpu.memory_space<vmem>>, vector<1x8x32xf32>
      %55 = vector.shape_cast %54 : vector<1x8x32xf32> to vector<8x32xf32>
      %c0_39 = arith.constant 0 : index
      %c0_40 = arith.constant 0 : index
      %c0_41 = arith.constant 0 : index
      %56 = vector.load %arg7[%c0_39, %c0_40, %c0_41] : memref<1x32x8xf32, #tpu.memory_space<vmem>>, vector<1x32x8xf32>
      %57 = vector.shape_cast %56 : vector<1x32x8xf32> to vector<32x8xf32>
      %cst_42 = arith.constant dense<0.000000e+00> : vector<8x8xf32>
      %58 = tpu.matmul %55, %57, %cst_42 {dimension_numbers = #tpu.dot_dimension_numbers<[1], [0], [0], [1], [0, 0, 1, 1], [], []>} : vector<8x32xf32>, vector<32x8xf32>, vector<8x8xf32> -> vector<8x8xf32>
      %c0_43 = arith.constant 0 : index
      %c0_44 = arith.constant 0 : index
      %c0_45 = arith.constant 0 : index
      %59 = vector.load %arg8[%c0_43, %c0_44, %c0_45] : memref<1x1x8xf32, #tpu.memory_space<vmem>>, vector<1x1x8xf32>
      %60 = vector.shape_cast %59 : vector<1x1x8xf32> to vector<1x8xf32>
      %61 = vector.broadcast %60 : vector<1x8xf32> to vector<8x8xf32>
      %62 = arith.addf %58, %61 : vector<8x8xf32>
      %c0_46 = arith.constant 0 : index
      %c0_47 = arith.constant 0 : index
      %c0_48 = arith.constant 0 : index
      %63 = vector.load %arg9[%c0_46, %c0_47, %c0_48] : memref<1x32x8xf32, #tpu.memory_space<vmem>>, vector<1x32x8xf32>
      %64 = vector.shape_cast %63 : vector<1x32x8xf32> to vector<32x8xf32>
      %cst_49 = arith.constant dense<0.000000e+00> : vector<8x8xf32>
      %65 = tpu.matmul %55, %64, %cst_49 {dimension_numbers = #tpu.dot_dimension_numbers<[1], [0], [0], [1], [0, 0, 1, 1], [], []>} : vector<8x32xf32>, vector<32x8xf32>, vector<8x8xf32> -> vector<8x8xf32>
      %c0_50 = arith.constant 0 : index
      %c0_51 = arith.constant 0 : index
      %c0_52 = arith.constant 0 : index
      %66 = vector.load %arg10[%c0_50, %c0_51, %c0_52] : memref<1x1x8xf32, #tpu.memory_space<vmem>>, vector<1x1x8xf32>
      %67 = vector.shape_cast %66 : vector<1x1x8xf32> to vector<1x8xf32>
      %68 = vector.broadcast %67 : vector<1x8xf32> to vector<8x8xf32>
      %69 = arith.addf %65, %68 : vector<8x8xf32>
      %70 = arith.index_cast %arg2 : i32 to index
      %c0_53 = arith.constant 0 : index
      %c0_54 = arith.constant 0 : index
      %71 = vector.load %arg17[%70, %c0_53, %c0_54] : memref<4x8x8xf32, #tpu.memory_space<vmem>>, vector<1x8x8xf32>
      %72 = vector.shape_cast %71 : vector<1x8x8xf32> to vector<8x8xf32>
      %73 = vector.shape_cast %62 : vector<8x8xf32> to vector<1x8x8xf32>
      tpu.vector_store %arg17[%70, %c0_53, %c0_54], %73 {strides = array<i32>} : memref<4x8x8xf32, #tpu.memory_space<vmem>>, vector<1x8x8xf32>,
      %74 = arith.index_cast %arg2 : i32 to index
      %c0_55 = arith.constant 0 : index
      %c0_56 = arith.constant 0 : index
      %75 = vector.load %arg18[%74, %c0_55, %c0_56] : memref<4x8x8xf32, #tpu.memory_space<vmem>>, vector<1x8x8xf32>
      %76 = vector.shape_cast %75 : vector<1x8x8xf32> to vector<8x8xf32>
      %77 = vector.shape_cast %69 : vector<8x8xf32> to vector<1x8x8xf32>
      tpu.vector_store %arg18[%74, %c0_55, %c0_56], %77 {strides = array<i32>} : memref<4x8x8xf32, #tpu.memory_space<vmem>>, vector<1x8x8xf32>,
    } else {
    }
    %5 = arith.index_cast %arg2 : i32 to index
    %c0_3 = arith.constant 0 : index
    %c0_4 = arith.constant 0 : index
    %6 = vector.load %arg17[%5, %c0_3, %c0_4] : memref<4x8x8xf32, #tpu.memory_space<vmem>>, vector<1x8x8xf32>
    %7 = vector.shape_cast %6 : vector<1x8x8xf32> to vector<8x8xf32>
    %8 = arith.index_cast %arg2 : i32 to index
    %c0_5 = arith.constant 0 : index
    %c0_6 = arith.constant 0 : index
    %9 = vector.load %arg18[%8, %c0_5, %c0_6] : memref<4x8x8xf32, #tpu.memory_space<vmem>>, vector<1x8x8xf32>
    %10 = vector.shape_cast %9 : vector<1x8x8xf32> to vector<8x8xf32>
    %c0_7 = arith.constant 0 : index
    %c0_8 = arith.constant 0 : index
    %c0_9 = arith.constant 0 : index
    %11 = vector.load %arg5[%c0_7, %c0_8, %c0_9] : memref<1x32x8xf32, #tpu.memory_space<vmem>>, vector<1x32x8xf32>
    %12 = vector.shape_cast %11 : vector<1x32x8xf32> to vector<32x8xf32>
    %cst = arith.constant dense<0.000000e+00> : vector<8x8xf32>
    %13 = tpu.matmul %1, %12, %cst {dimension_numbers = #tpu.dot_dimension_numbers<[1], [0], [0], [1], [0, 0, 1, 1], [], []>} : vector<8x32xf32>, vector<32x8xf32>, vector<8x8xf32> -> vector<8x8xf32>
    %c0_10 = arith.constant 0 : index
    %c0_11 = arith.constant 0 : index
    %c0_12 = arith.constant 0 : index
    %14 = vector.load %arg6[%c0_10, %c0_11, %c0_12] : memref<1x1x8xf32, #tpu.memory_space<vmem>>, vector<1x1x8xf32>
    %15 = vector.shape_cast %14 : vector<1x1x8xf32> to vector<1x8xf32>
    %16 = vector.broadcast %15 : vector<1x8xf32> to vector<8x8xf32>
    %17 = arith.addf %13, %16 : vector<8x8xf32>
    %cst_13 = arith.constant 0.353553385 : f32
    %18 = vector.broadcast %cst_13 : f32 to vector<8x8xf32>
    %19 = arith.mulf %17, %18 : vector<8x8xf32>
    %cst_14 = arith.constant dense<0.000000e+00> : vector<8x8xf32>
    %20 = tpu.matmul %19, %7, %cst_14 {dimension_numbers = #tpu.dot_dimension_numbers<[1], [1], [0], [0], [0, 0, 1, 0], [], []>} : vector<8x8xf32>, vector<8x8xf32>, vector<8x8xf32> -> vector<8x8xf32>
    %c0_15 = arith.constant 0 : index
    %c0_16 = arith.constant 0 : index
    %c0_17 = arith.constant 0 : index
    %c0_18 = arith.constant 0 : index
    %21 = vector.load %arg11[%c0_15, %c0_16, %c0_17, %c0_18] : memref<1x1x8x8xf32, #tpu.memory_space<vmem>>, vector<1x1x8x8xf32>
    %22 = vector.shape_cast %21 : vector<1x1x8x8xf32> to vector<8x8xf32>
    %23 = arith.addf %20, %22 : vector<8x8xf32>
    %cst_19 = arith.constant dense<0xFF800000> : vector<8xf32>
    %24 = vector.multi_reduction <maximumf>, %23, %cst_19 [1] : vector<8x8xf32> to vector<8xf32>
    %25 = vector.shape_cast %24 : vector<8xf32> to vector<8x1xf32>
    %26 = vector.broadcast %25 : vector<8x1xf32> to vector<8x8xf32>
    %27 = arith.subf %23, %26 : vector<8x8xf32>
    %28 = math.exp %27 : vector<8x8xf32>
    %cst_20 = arith.constant dense<0.000000e+00> : vector<8xf32>
    %29 = vector.multi_reduction <add>, %28, %cst_20 [1] : vector<8x8xf32> to vector<8xf32>
    %30 = vector.shape_cast %29 : vector<8xf32> to vector<8x1xf32>
    %31 = tpu.reciprocal %30 {approx = true} : vector<8x1xf32> -> vector<8x1xf32>
    %32 = arith.mulf %30, %31 : vector<8x1xf32>
    %cst_21 = arith.constant 2.000000e+00 : f32
    %33 = vector.broadcast %cst_21 : f32 to vector<8x1xf32>
    %34 = arith.subf %33, %32 : vector<8x1xf32>
    %35 = arith.mulf %31, %34 : vector<8x1xf32>
    %36 = vector.broadcast %35 : vector<8x1xf32> to vector<8x8xf32>
    %37 = arith.mulf %28, %36 : vector<8x8xf32>
    %c0_22 = arith.constant 0 : index
    %c0_23 = arith.constant 0 : index
    %c0_24 = arith.constant 0 : index
    %c0_25 = arith.constant 0 : index
    %38 = vector.load %arg15[%c0_22, %c0_23, %c0_24, %c0_25] : memref<1x1x8x8xf32, #tpu.memory_space<vmem>>, vector<1x1x8x8xf32>
    %39 = vector.shape_cast %38 : vector<1x1x8x8xf32> to vector<8x8xf32>
    %40 = vector.shape_cast %37 : vector<8x8xf32> to vector<1x1x8x8xf32>
    tpu.vector_store %arg15[%c0_22, %c0_23, %c0_24, %c0_25], %40 {strides = array<i32>} : memref<1x1x8x8xf32, #tpu.memory_space<vmem>>, vector<1x1x8x8xf32>,
    %cst_26 = arith.constant dense<0.000000e+00> : vector<8x8xf32>
    %41 = tpu.matmul %37, %10, %cst_26 {dimension_numbers = #tpu.dot_dimension_numbers<[1], [0], [0], [1], [0, 0, 1, 1], [], []>} : vector<8x8xf32>, vector<8x8xf32>, vector<8x8xf32> -> vector<8x8xf32>
    %c0_27 = arith.constant 0 : index
    %c0_28 = arith.constant 0 : index
    %c0_29 = arith.constant 0 : index
    %42 = vector.load %arg12[%c0_27, %c0_28, %c0_29] : memref<1x8x32xf32, #tpu.memory_space<vmem>>, vector<1x8x32xf32>
    %43 = vector.shape_cast %42 : vector<1x8x32xf32> to vector<8x32xf32>
    %cst_30 = arith.constant dense<0.000000e+00> : vector<8x32xf32>
    %44 = tpu.matmul %41, %43, %cst_30 {dimension_numbers = #tpu.dot_dimension_numbers<[1], [0], [0], [1], [0, 0, 1, 1], [], []>} : vector<8x8xf32>, vector<8x32xf32>, vector<8x32xf32> -> vector<8x32xf32>
    %c0_i32_31 = arith.constant 0 : i32
    %45 = arith.cmpi eq, %arg2, %c0_i32_31 : i32
    %46 = arith.extui %45 : i1 to i32
    %c0_i32_32 = arith.constant 0 : i32
    %47 = arith.cmpi ne, %46, %c0_i32_32 : i32
    scf.if %47 {
      %c0_36 = arith.constant 0 : index
      %c0_37 = arith.constant 0 : index
      %54 = vector.load %arg13[%c0_36, %c0_37] : memref<1x32xf32, #tpu.memory_space<vmem>>, vector<1x32xf32>
      %55 = vector.broadcast %54 : vector<1x32xf32> to vector<8x32xf32>
      %56 = arith.addf %44, %55 : vector<8x32xf32>
      %c0_38 = arith.constant 0 : index
      %c0_39 = arith.constant 0 : index
      %57 = vector.load %arg16[%c0_38, %c0_39] : memref<8x32xf32, #tpu.memory_space<vmem>>, vector<8x32xf32>
      tpu.vector_store %arg16[%c0_38, %c0_39], %56 {strides = array<i32>} : memref<8x32xf32, #tpu.memory_space<vmem>>, vector<8x32xf32>,
    } else {
    }
    %c0_i32_33 = arith.constant 0 : i32
    %48 = arith.cmpi sgt, %arg2, %c0_i32_33 : i32
    %49 = arith.extui %48 : i1 to i32
    %c0_i32_34 = arith.constant 0 : i32
    %50 = arith.cmpi ne, %49, %c0_i32_34 : i32
    scf.if %50 {
      %c0_36 = arith.constant 0 : index
      %c0_37 = arith.constant 0 : index
      %54 = vector.load %arg16[%c0_36, %c0_37] : memref<8x32xf32, #tpu.memory_space<vmem>>, vector<8x32xf32>
      %55 = arith.addf %54, %44 : vector<8x32xf32>
      %c0_38 = arith.constant 0 : index
      %c0_39 = arith.constant 0 : index
      %56 = vector.load %arg16[%c0_38, %c0_39] : memref<8x32xf32, #tpu.memory_space<vmem>>, vector<8x32xf32>
      tpu.vector_store %arg16[%c0_38, %c0_39], %55 {strides = array<i32>} : memref<8x32xf32, #tpu.memory_space<vmem>>, vector<8x32xf32>,
    } else {
    }
    %c3_i32 = arith.constant 3 : i32
    %51 = arith.cmpi eq, %arg2, %c3_i32 : i32
    %52 = arith.extui %51 : i1 to i32
    %c0_i32_35 = arith.constant 0 : i32
    %53 = arith.cmpi ne, %52, %c0_i32_35 : i32
    scf.if %53 {
      %c0_36 = arith.constant 0 : index
      %c0_37 = arith.constant 0 : index
      %54 = vector.load %arg16[%c0_36, %c0_37] : memref<8x32xf32, #tpu.memory_space<vmem>>, vector<8x32xf32>
      %c0_38 = arith.constant 0 : index
      %c0_39 = arith.constant 0 : index
      %c0_40 = arith.constant 0 : index
      %55 = vector.load %arg14[%c0_38, %c0_39, %c0_40] : memref<1x8x32xf32, #tpu.memory_space<vmem>>, vector<1x8x32xf32>
      %56 = vector.shape_cast %55 : vector<1x8x32xf32> to vector<8x32xf32>
      %57 = vector.shape_cast %54 : vector<8x32xf32> to vector<1x8x32xf32>
      tpu.vector_store %arg14[%c0_38, %c0_39, %c0_40], %57 {strides = array<i32>} : memref<1x8x32xf32, #tpu.memory_space<vmem>>, vector<1x8x32xf32>,
    } else {
    }
    return
  }
  func.func @transform_0(%arg0: i32, %arg1: i32, %arg2: i32) -> (i32, i32, i32) {
    %c0_i32 = arith.constant 0 : i32
    %c0_i32_0 = arith.constant 0 : i32
    return %arg0, %arg1, %c0_i32 : i32, i32, i32
  }
  func.func @transform_1(%arg0: i32, %arg1: i32, %arg2: i32) -> (i32, i32, i32) {
    %c0_i32 = arith.constant 0 : i32
    %c0_i32_0 = arith.constant 0 : i32
    %c0_i32_1 = arith.constant 0 : i32
    return %arg0, %c0_i32, %c0_i32_0 : i32, i32, i32
  }
  func.func @transform_2(%arg0: i32, %arg1: i32, %arg2: i32) -> (i32, i32, i32) {
    %c0_i32 = arith.constant 0 : i32
    %c0_i32_0 = arith.constant 0 : i32
    %c0_i32_1 = arith.constant 0 : i32
    return %arg2, %c0_i32, %c0_i32_0 : i32, i32, i32
  }
  func.func @transform_3(%arg0: i32, %arg1: i32, %arg2: i32) -> (i32, i32, i32) {
    %c0_i32 = arith.constant 0 : i32
    %c0_i32_0 = arith.constant 0 : i32
    %c0_i32_1 = arith.constant 0 : i32
    return %arg2, %c0_i32, %c0_i32_0 : i32, i32, i32
  }
  func.func @transform_4(%arg0: i32, %arg1: i32, %arg2: i32) -> (i32, i32, i32) {
    %c0_i32 = arith.constant 0 : i32
    %c0_i32_0 = arith.constant 0 : i32
    %c0_i32_1 = arith.constant 0 : i32
    return %arg2, %c0_i32, %c0_i32_0 : i32, i32, i32
  }
  func.func @transform_5(%arg0: i32, %arg1: i32, %arg2: i32) -> (i32, i32, i32) {
    %c0_i32 = arith.constant 0 : i32
    %c0_i32_0 = arith.constant 0 : i32
    %c0_i32_1 = arith.constant 0 : i32
    return %arg2, %c0_i32, %c0_i32_0 : i32, i32, i32
  }
  func.func @transform_6(%arg0: i32, %arg1: i32, %arg2: i32) -> (i32, i32, i32) {
    %c0_i32 = arith.constant 0 : i32
    %c0_i32_0 = arith.constant 0 : i32
    %c0_i32_1 = arith.constant 0 : i32
    return %arg2, %c0_i32, %c0_i32_0 : i32, i32, i32
  }
  func.func @transform_7(%arg0: i32, %arg1: i32, %arg2: i32) -> (i32, i32, i32) {
    %c0_i32 = arith.constant 0 : i32
    %c0_i32_0 = arith.constant 0 : i32
    %c0_i32_1 = arith.constant 0 : i32
    return %arg2, %c0_i32, %c0_i32_0 : i32, i32, i32
  }
  func.func @transform_8(%arg0: i32, %arg1: i32, %arg2: i32) -> (i32, i32, i32, i32) {
    %c0_i32 = arith.constant 0 : i32
    %c0_i32_0 = arith.constant 0 : i32
    return %arg0, %arg2, %arg1, %c0_i32 : i32, i32, i32, i32
  }
  func.func @transform_9(%arg0: i32, %arg1: i32, %arg2: i32) -> (i32, i32, i32) {
    %c0_i32 = arith.constant 0 : i32
    %c0_i32_0 = arith.constant 0 : i32
    %c0_i32_1 = arith.constant 0 : i32
    return %arg2, %c0_i32, %c0_i32_0 : i32, i32, i32
  }
  func.func @transform_10(%arg0: i32, %arg1: i32, %arg2: i32) -> (i32, i32) {
    %c0_i32 = arith.constant 0 : i32
    %c0_i32_0 = arith.constant 0 : i32
    %c0_i32_1 = arith.constant 0 : i32
    return %c0_i32, %c0_i32_0 : i32, i32
  }
  func.func @transform_11(%arg0: i32, %arg1: i32, %arg2: i32) -> (i32, i32, i32) {
    %c0_i32 = arith.constant 0 : i32
    %c0_i32_0 = arith.constant 0 : i32
    return %arg0, %arg1, %c0_i32 : i32, i32, i32
  }
  func.func @transform_12(%arg0: i32, %arg1: i32, %arg2: i32) -> (i32, i32, i32, i32) {
    %c0_i32 = arith.constant 0 : i32
    %c0_i32_0 = arith.constant 0 : i32
    return %arg0, %arg2, %arg1, %c0_i32 : i32, i32, i32, i32
  }
}

</mosaic_0001>

<llo_original>
// kernel: tpu_custom_call.1
$region0: #{tpu_custom_call.1}
  #allocation0 [shape = 'u32[]', space=smem, size = 0x4, offset = 0x4, fixed_abs, tag = 'smem constant byte address 0x4 - core index']
  #allocation1 [shape = 'u32[144,128]{1,0:T(1,128)}', space=vmem, size = 0x12000, scoped, tag = 'internal scratch']
  #allocation2 [shape = 'f32[8,32]{1,0:T(8,128)}', space=vmem, size = 0x1000, scoped, tag = 'scratch operand']
  #allocation3 [shape = 'f32[4,8,8]{2,1,0:T(8,128)}', space=vmem, size = 0x4000, scoped, tag = 'scratch operand']
  #allocation4 [shape = 'f32[4,8,8]{2,1,0:T(8,128)}', space=vmem, size = 0x4000, scoped, tag = 'scratch operand']
  %s0 = inlined_call_operand.vmem [shape: f32[2,8,32], index: 0, kind: input, shape index: {}]
  %s1 = inlined_call_operand.vmem [shape: f32[2,8,32], index: 1, kind: input, shape index: {}]
  %s2 = inlined_call_operand.vmem [shape: f32[4,32,8], index: 2, kind: input, shape index: {}]
  %s3 = inlined_call_operand.vmem [shape: f32[4,1,8], index: 3, kind: input, shape index: {}]
  %s4 = inlined_call_operand.vmem [shape: f32[4,32,8], index: 4, kind: input, shape index: {}]
  %s5 = inlined_call_operand.vmem [shape: f32[4,1,8], index: 5, kind: input, shape index: {}]
  %s6 = inlined_call_operand.vmem [shape: f32[4,32,8], index: 6, kind: input, shape index: {}]
  %s7 = inlined_call_operand.vmem [shape: f32[4,1,8], index: 7, kind: input, shape index: {}]
  %s8 = inlined_call_operand.vmem [shape: f32[2,4,8,8], index: 8, kind: input, shape index: {}]
  %s9 = inlined_call_operand.vmem [shape: f32[4,8,32], index: 9, kind: input, shape index: {}]
  %s10 = inlined_call_operand.vmem [shape: f32[1,32], index: 10, kind: input, shape index: {}]
  %s11 = inlined_call_operand.hbm [shape: f32[2,8,32], index: 11, kind: output, shape index: {0}]
  %s12 = inlined_call_operand.hbm [shape: f32[2,4,8,8], index: 12, kind: output, shape index: {1}]
  %13 = xla_tuple %s11, %s12
  %s14 = sld [smem:[#allocation0]]
  $region101: #{tpu_custom_call.1} parent=0
    _
  %s16 = ssub.s32 1, %s14
  %s17 = scalar_select 0, %s16, %s14
  $region1: #{tpu_custom_call.1} parent=0
    #allocation5 [shape = 'u8[8192]{0}', space=vmem, size = 0x2000, scoped, tag = 'output window, operand 0']
    #allocation6 [shape = 's32[2]{0}', space=sflag, size = 0x8, scoped, tag = 'scoped memory for tpu_custom_call.1']
    #allocation7 [shape = 'u8[8192]{0}', space=vmem, size = 0x2000, scoped, tag = 'output window, operand 1']
    #allocation8 [shape = 's32[2]{0}', space=sflag, size = 0x8, scoped, tag = 'scoped memory for tpu_custom_call.1']
    %18 = vsyncpa [#allocation6], 0
    %s19 = scalar_lea.sflag [#allocation6], 1
    %20 = vsyncpa %s19, 0
    %21 = vsyncpa [#allocation8], 0
    %s22 = scalar_lea.sflag [#allocation8], 1
    %23 = vsyncpa %s22, 0
    loop: start=0, step=1, limit=10
    $region2: #{tpu_custom_call.1} parent=1 // loop_pre_header
      _
    $region3: #{tpu_custom_call.1} parent=1 // loop_header
      %s25 = sphi 0, %s29
      %p26 = scmp.ge.s32.totalorder %s25, 10
      %s32 = sphi 0, %s51
      %s33 = sphi 0, %s47
      %s34 = sphi 0, %s43
      %s35 = sphi 0, %s32
      %s36 = sphi 0, %s33
      %s37 = sphi 0, %s34
      %s38 = sphi 0, %s35
      %s39 = sphi 0, %s36
      %s40 = sphi 0, %s37
      %s56 = sphi 0, %s58
      %s59 = sphi 0, %s56
      %s60 = sphi 0, %s59
      %s76 = sphi 0, %s60
      %s82 = sphi 0, %s84
      %s85 = sphi 0, %s82
      %s86 = sphi 0, %s85
      %s102 = sphi 0, %s86
      %s108 = sphi 0, %s110
      %s111 = sphi 0, %s108
      %s112 = sphi 0, %s111
      %s128 = sphi 0, %s112
      %s134 = sphi 0, %s136
      %s137 = sphi 0, %s134
      %s138 = sphi 0, %s137
      %s154 = sphi 0, %s138
      %s160 = sphi 0, %s162
      %s163 = sphi 0, %s160
      %s164 = sphi 0, %s163
      %s180 = sphi 0, %s164
      %s186 = sphi 0, %s188
      %s189 = sphi 0, %s186
      %s190 = sphi 0, %s189
      %s206 = sphi 0, %s190
      %s212 = sphi 0, %s214
      %s215 = sphi 0, %s212
      %s216 = sphi 0, %s215
      %s232 = sphi 0, %s216
      %s238 = sphi 0, %s240
      %s241 = sphi 0, %s238
      %s242 = sphi 0, %s241
      %s258 = sphi 0, %s242
      %s268 = sphi 0, %s270
      %s271 = sphi 0, %s268
      %s272 = sphi 0, %s271
      %s288 = sphi 0, %s272
      %s294 = sphi 0, %s296
      %s297 = sphi 0, %s294
      %s298 = sphi 0, %s297
      %s314 = sphi 0, %s298
      %s318 = sphi 0, %s318
      %s320 = sphi 0, %s318
      %s321 = sphi 0, %s320
      %s335 = sphi 0, %s321
      %s343 = sphi 0, %s345
      %s346 = sphi 0, %s343
      %s347 = sphi 0, %s346
      %s363 = sphi 0, %s347
      %s373 = sphi 0, %s375
      %s376 = sphi 0, %s373
      %s377 = sphi 0, %s376
      %s393 = sphi 0, %s377
    $region4: #{tpu_custom_call.1} parent=1 // loop_header_branch
      %28 = sbr.rel (%p26) target = $region8
    $region5: #{tpu_custom_call.1} parent=1 // loop_body
      %s30 = ssub.s32 %s25, 1
      %s31 = ssub.s32 %s25, 2
      %s41 = sadd.s32 1, %s34
      %p42 = scmp.ge.s32.totalorder %s41, 4
      %s43 = scalar_select %p42, 0, %s41
      %s44 = sadd.s32 1, %s33
      %s45 = scalar_select %p42, %s44, %s33
      %p46 = scmp.ge.s32.totalorder %s45, 1
      %s47 = scalar_select %p46, 0, %s45
      %s48 = sadd.s32 1, %s32
      %s49 = scalar_select %p46, %s48, %s32
      %p50 = scmp.ge.s32.totalorder %s49, 2
      %s51 = scalar_select %p50, 0, %s49
      %s52 = ssub.s32 %s32, %s51
      %s53 = ssub.s32 %s33, %s47
      %s54 = sor.u32 %s52, %s53
      %p55 = scmp.eq.s32.totalorder %s54, 0
      %s57 = sadd.s32 %s56, 1
      %s58 = scalar_select %p55, %s56, %s57
      %p61 = pneg %p55
      %p62 = scmp.eq.s32.totalorder %s25, 7
      %p63 = por %p61, %p62
      %p64 = scmp.ne.s32.totalorder %s56, %s59
      %p65 = scmp.eq.s32.totalorder %s25, 0
      %p66 = por %p64, %p65
      %p67 = scmp.ne.s32.totalorder %s56, %s59
      %p68 = scmp.eq.s32.totalorder %s30, 7
      %p69 = por %p67, %p68
      %p70 = scmp.ne.s32.totalorder %s59, %s60
      %p71 = scmp.eq.s32.totalorder %s30, 0
      %p72 = por %p70, %p71
      %p73 = scmp.ne.s32.totalorder %s59, %s60
      %p74 = scmp.eq.s32.totalorder %s31, 7
      %p75 = por %p73, %p74
      %p77 = scmp.ne.s32.totalorder %s60, %s76
      %p78 = scmp.eq.s32.totalorder %s31, 0
      %p79 = por %p77, %p78
      %s80 = ssub.s32 %s32, %s51
      %p81 = scmp.eq.s32.totalorder %s80, 0
      %s83 = sadd.s32 %s82, 1
      %s84 = scalar_select %p81, %s82, %s83
      %p87 = pneg %p81
      %p88 = scmp.eq.s32.totalorder %s25, 7
      %p89 = por %p87, %p88
      %p90 = scmp.ne.s32.totalorder %s82, %s85
      %p91 = scmp.eq.s32.totalorder %s25, 0
      %p92 = por %p90, %p91
      %p93 = scmp.ne.s32.totalorder %s82, %s85
      %p94 = scmp.eq.s32.totalorder %s30, 7
      %p95 = por %p93, %p94
      %p96 = scmp.ne.s32.totalorder %s85, %s86
      %p97 = scmp.eq.s32.totalorder %s30, 0
      %p98 = por %p96, %p97
      %p99 = scmp.ne.s32.totalorder %s85, %s86
      %p100 = scmp.eq.s32.totalorder %s31, 7
      %p101 = por %p99, %p100
      %p103 = scmp.ne.s32.totalorder %s86, %s102
      %p104 = scmp.eq.s32.totalorder %s31, 0
      %p105 = por %p103, %p104
      %s106 = ssub.s32 %s34, %s43
      %p107 = scmp.eq.s32.totalorder %s106, 0
      %s109 = sadd.s32 %s108, 1
      %s110 = scalar_select %p107, %s108, %s109
      %p113 = pneg %p107
      %p114 = scmp.eq.s32.totalorder %s25, 7
      %p115 = por %p113, %p114
      %p116 = scmp.ne.s32.totalorder %s108, %s111
      %p117 = scmp.eq.s32.totalorder %s25, 0
      %p118 = por %p116, %p117
      %p119 = scmp.ne.s32.totalorder %s108, %s111
      %p120 = scmp.eq.s32.totalorder %s30, 7
      %p121 = por %p119, %p120
      %p122 = scmp.ne.s32.totalorder %s111, %s112
      %p123 = scmp.eq.s32.totalorder %s30, 0
      %p124 = por %p122, %p123
      %p125 = scmp.ne.s32.totalorder %s111, %s112
      %p126 = scmp.eq.s32.totalorder %s31, 7
      %p127 = por %p125, %p126
      %p129 = scmp.ne.s32.totalorder %s112, %s128
      %p130 = scmp.eq.s32.totalorder %s31, 0
      %p131 = por %p129, %p130
      %s132 = ssub.s32 %s34, %s43
      %p133 = scmp.eq.s32.totalorder %s132, 0
      %s135 = sadd.s32 %s134, 1
      %s136 = scalar_select %p133, %s134, %s135
      %p139 = pneg %p133
      %p140 = scmp.eq.s32.totalorder %s25, 7
      %p141 = por %p139, %p140
      %p142 = scmp.ne.s32.totalorder %s134, %s137
      %p143 = scmp.eq.s32.totalorder %s25, 0
      %p144 = por %p142, %p143
      %p145 = scmp.ne.s32.totalorder %s134, %s137
      %p146 = scmp.eq.s32.totalorder %s30, 7
      %p147 = por %p145, %p146
      %p148 = scmp.ne.s32.totalorder %s137, %s138
      %p149 = scmp.eq.s32.totalorder %s30, 0
      %p150 = por %p148, %p149
      %p151 = scmp.ne.s32.totalorder %s137, %s138
      %p152 = scmp.eq.s32.totalorder %s31, 7
      %p153 = por %p151, %p152
      %p155 = scmp.ne.s32.totalorder %s138, %s154
      %p156 = scmp.eq.s32.totalorder %s31, 0
      %p157 = por %p155, %p156
      %s158 = ssub.s32 %s34, %s43
      %p159 = scmp.eq.s32.totalorder %s158, 0
      %s161 = sadd.s32 %s160, 1
      %s162 = scalar_select %p159, %s160, %s161
      %p165 = pneg %p159
      %p166 = scmp.eq.s32.totalorder %s25, 7
      %p167 = por %p165, %p166
      %p168 = scmp.ne.s32.totalorder %s160, %s163
      %p169 = scmp.eq.s32.totalorder %s25, 0
      %p170 = por %p168, %p169
      %p171 = scmp.ne.s32.totalorder %s160, %s163
      %p172 = scmp.eq.s32.totalorder %s30, 7
      %p173 = por %p171, %p172
      %p174 = scmp.ne.s32.totalorder %s163, %s164
      %p175 = scmp.eq.s32.totalorder %s30, 0
      %p176 = por %p174, %p175
      %p177 = scmp.ne.s32.totalorder %s163, %s164
      %p178 = scmp.eq.s32.totalorder %s31, 7
      %p179 = por %p177, %p178
      %p181 = scmp.ne.s32.totalorder %s164, %s180
      %p182 = scmp.eq.s32.totalorder %s31, 0
      %p183 = por %p181, %p182
      %s184 = ssub.s32 %s34, %s43
      %p185 = scmp.eq.s32.totalorder %s184, 0
      %s187 = sadd.s32 %s186, 1
      %s188 = scalar_select %p185, %s186, %s187
      %p191 = pneg %p185
      %p192 = scmp.eq.s32.totalorder %s25, 7
      %p193 = por %p191, %p192
      %p194 = scmp.ne.s32.totalorder %s186, %s189
      %p195 = scmp.eq.s32.totalorder %s25, 0
      %p196 = por %p194, %p195
      %p197 = scmp.ne.s32.totalorder %s186, %s189
      %p198 = scmp.eq.s32.totalorder %s30, 7
      %p199 = por %p197, %p198
      %p200 = scmp.ne.s32.totalorder %s189, %s190
      %p201 = scmp.eq.s32.totalorder %s30, 0
      %p202 = por %p200, %p201
      %p203 = scmp.ne.s32.totalorder %s189, %s190
      %p204 = scmp.eq.s32.totalorder %s31, 7
      %p205 = por %p203, %p204
      %p207 = scmp.ne.s32.totalorder %s190, %s206
      %p208 = scmp.eq.s32.totalorder %s31, 0
      %p209 = por %p207, %p208
      %s210 = ssub.s32 %s34, %s43
      %p211 = scmp.eq.s32.totalorder %s210, 0
      %s213 = sadd.s32 %s212, 1
      %s214 = scalar_select %p211, %s212, %s213
      %p217 = pneg %p211
      %p218 = scmp.eq.s32.totalorder %s25, 7
      %p219 = por %p217, %p218
      %p220 = scmp.ne.s32.totalorder %s212, %s215
      %p221 = scmp.eq.s32.totalorder %s25, 0
      %p222 = por %p220, %p221
      %p223 = scmp.ne.s32.totalorder %s212, %s215
      %p224 = scmp.eq.s32.totalorder %s30, 7
      %p225 = por %p223, %p224
      %p226 = scmp.ne.s32.totalorder %s215, %s216
      %p227 = scmp.eq.s32.totalorder %s30, 0
      %p228 = por %p226, %p227
      %p229 = scmp.ne.s32.totalorder %s215, %s216
      %p230 = scmp.eq.s32.totalorder %s31, 7
      %p231 = por %p229, %p230
      %p233 = scmp.ne.s32.totalorder %s216, %s232
      %p234 = scmp.eq.s32.totalorder %s31, 0
      %p235 = por %p233, %p234
      %s236 = ssub.s32 %s34, %s43
      %p237 = scmp.eq.s32.totalorder %s236, 0
      %s239 = sadd.s32 %s238, 1
      %s240 = scalar_select %p237, %s238, %s239
      %p243 = pneg %p237
      %p244 = scmp.eq.s32.totalorder %s25, 7
      %p245 = por %p243, %p244
      %p246 = scmp.ne.s32.totalorder %s238, %s241
      %p247 = scmp.eq.s32.totalorder %s25, 0
      %p248 = por %p246, %p247
      %p249 = scmp.ne.s32.totalorder %s238, %s241
      %p250 = scmp.eq.s32.totalorder %s30, 7
      %p251 = por %p249, %p250
      %p252 = scmp.ne.s32.totalorder %s241, %s242
      %p253 = scmp.eq.s32.totalorder %s30, 0
      %p254 = por %p252, %p253
      %p255 = scmp.ne.s32.totalorder %s241, %s242
      %p256 = scmp.eq.s32.totalorder %s31, 7
      %p257 = por %p255, %p256
      %p259 = scmp.ne.s32.totalorder %s242, %s258
      %p260 = scmp.eq.s32.totalorder %s31, 0
      %p261 = por %p259, %p260
      %s262 = ssub.s32 %s32, %s51
      %s263 = ssub.s32 %s34, %s43
      %s264 = sor.u32 %s262, %s263
      %s265 = ssub.s32 %s33, %s47
      %s266 = sor.u32 %s264, %s265
      %p267 = scmp.eq.s32.totalorder %s266, 0
      %s269 = sadd.s32 %s268, 1
      %s270 = scalar_select %p267, %s268, %s269
      %p273 = pneg %p267
      %p274 = scmp.eq.s32.totalorder %s25, 7
      %p275 = por %p273, %p274
      %p276 = scmp.ne.s32.totalorder %s268, %s271
      %p277 = scmp.eq.s32.totalorder %s25, 0
      %p278 = por %p276, %p277
      %p279 = scmp.ne.s32.totalorder %s268, %s271
      %p280 = scmp.eq.s32.totalorder %s30, 7
      %p281 = por %p279, %p280
      %p282 = scmp.ne.s32.totalorder %s271, %s272
      %p283 = scmp.eq.s32.totalorder %s30, 0
      %p284 = por %p282, %p283
      %p285 = scmp.ne.s32.totalorder %s271, %s272
      %p286 = scmp.eq.s32.totalorder %s31, 7
      %p287 = por %p285, %p286
      %p289 = scmp.ne.s32.totalorder %s272, %s288
      %p290 = scmp.eq.s32.totalorder %s31, 0
      %p291 = por %p289, %p290
      %s292 = ssub.s32 %s34, %s43
      %p293 = scmp.eq.s32.totalorder %s292, 0
      %s295 = sadd.s32 %s294, 1
      %s296 = scalar_select %p293, %s294, %s295
      %p299 = pneg %p293
      %p300 = scmp.eq.s32.totalorder %s25, 7
      %p301 = por %p299, %p300
      %p302 = scmp.ne.s32.totalorder %s294, %s297
      %p303 = scmp.eq.s32.totalorder %s25, 0
      %p304 = por %p302, %p303
      %p305 = scmp.ne.s32.totalorder %s294, %s297
      %p306 = scmp.eq.s32.totalorder %s30, 7
      %p307 = por %p305, %p306
      %p308 = scmp.ne.s32.totalorder %s297, %s298
      %p309 = scmp.eq.s32.totalorder %s30, 0
      %p310 = por %p308, %p309
      %p311 = scmp.ne.s32.totalorder %s297, %s298
      %p312 = scmp.eq.s32.totalorder %s31, 7
      %p313 = por %p311, %p312
      %p315 = scmp.ne.s32.totalorder %s298, %s314
      %p316 = scmp.eq.s32.totalorder %s31, 0
      %p317 = por %p315, %p316
      %s319 = sadd.s32 %s318, 1
      %p322 = scmp.eq.s32.totalorder %s25, 7
      %p323 = scmp.ne.s32.totalorder %s318, %s320
      %p324 = scmp.eq.s32.totalorder %s25, 0
      %p325 = por %p323, %p324
      %p326 = scmp.ne.s32.totalorder %s318, %s320
      %p327 = scmp.eq.s32.totalorder %s30, 7
      %p328 = por %p326, %p327
      %p329 = scmp.ne.s32.totalorder %s320, %s321
      %p330 = scmp.eq.s32.totalorder %s30, 0
      %p331 = por %p329, %p330
      %p332 = scmp.ne.s32.totalorder %s320, %s321
      %p333 = scmp.eq.s32.totalorder %s31, 7
      %p334 = por %p332, %p333
      %p336 = scmp.ne.s32.totalorder %s321, %s335
      %p337 = scmp.eq.s32.totalorder %s31, 0
      %p338 = por %p336, %p337
      %s339 = ssub.s32 %s32, %s51
      %s340 = ssub.s32 %s33, %s47
      %s341 = sor.u32 %s339, %s340
      %p342 = scmp.eq.s32.totalorder %s341, 0
      %s344 = sadd.s32 %s343, 1
      %s345 = scalar_select %p342, %s343, %s344
      %p348 = pneg %p342
      %p349 = scmp.eq.s32.totalorder %s25, 7
      %p350 = por %p348, %p349
      %p351 = scmp.ne.s32.totalorder %s343, %s346
      %p352 = scmp.eq.s32.totalorder %s25, 0
      %p353 = por %p351, %p352
      %p354 = scmp.ne.s32.totalorder %s343, %s346
      %p355 = scmp.eq.s32.totalorder %s30, 7
      %p356 = por %p354, %p355
      %p357 = scmp.ne.s32.totalorder %s346, %s347
      %p358 = scmp.eq.s32.totalorder %s30, 0
      %p359 = por %p357, %p358
      %p360 = scmp.ne.s32.totalorder %s346, %s347
      %p361 = scmp.eq.s32.totalorder %s31, 7
      %p362 = por %p360, %p361
      %p364 = scmp.ne.s32.totalorder %s347, %s363
      %p365 = scmp.eq.s32.totalorder %s31, 0
      %p366 = por %p364, %p365
      %s367 = ssub.s32 %s32, %s51
      %s368 = ssub.s32 %s34, %s43
      %s369 = sor.u32 %s367, %s368
      %s370 = ssub.s32 %s33, %s47
      %s371 = sor.u32 %s369, %s370
      %p372 = scmp.eq.s32.totalorder %s371, 0
      %s374 = sadd.s32 %s373, 1
      %s375 = scalar_select %p372, %s373, %s374
      %p378 = pneg %p372
      %p379 = scmp.eq.s32.totalorder %s25, 7
      %p380 = por %p378, %p379
      %p381 = scmp.ne.s32.totalorder %s373, %s376
      %p382 = scmp.eq.s32.totalorder %s25, 0
      %p383 = por %p381, %p382
      %p384 = scmp.ne.s32.totalorder %s373, %s376
      %p385 = scmp.eq.s32.totalorder %s30, 7
      %p386 = por %p384, %p385
      %p387 = scmp.ne.s32.totalorder %s376, %s377
      %p388 = scmp.eq.s32.totalorder %s30, 0
      %p389 = por %p387, %p388
      %p390 = scmp.ne.s32.totalorder %s376, %s377
      %p391 = scmp.eq.s32.totalorder %s31, 7
      %p392 = por %p390, %p391
      %p394 = scmp.ne.s32.totalorder %s377, %s393
      %p395 = scmp.eq.s32.totalorder %s31, 0
      %p396 = por %p394, %p395
      %p397 = scmp.le.s32.totalorder 1, %s25
      %p398 = scmp.lt.s32.totalorder %s25, 9
      %p399 = pnand %p397, %p398
      %p400 = pneg %p399
      // Predicated region
      $region9: #{tpu_custom_call.1} parent=5 // pred_check
        _
      $region10: #{tpu_custom_call.1} parent=5 // pred_check_branch
        %402 = sbr.rel (%p399) target = $region12
      $region11: #{tpu_custom_call.1} parent=5 // pred_region
        %s403 = ssub.s32 %s25, 1
        // Predicated region
        $region13: #{tpu_custom_call.1} parent=11 // pred_check
          %p404 = pneg %p331
        $region14: #{tpu_custom_call.1} parent=11 // pred_check_branch
          %406 = sbr.rel (%p404) target = $region16
        $region15: #{tpu_custom_call.1} parent=11 // pred_region
          _
        $region16: #{tpu_custom_call.1} parent=11 // pred_fallthru
          _
      $region12: #{tpu_custom_call.1} parent=5 // pred_fallthru
        _
      %p407 = scmp.lt.s32.totalorder %s25, 8
      // Predicated region
      $region17: #{tpu_custom_call.1} parent=5 // pred_check
        %p408 = pneg %p407
      $region18: #{tpu_custom_call.1} parent=5 // pred_check_branch
        %410 = sbr.rel (%p408) target = $region20
      $region19: #{tpu_custom_call.1} parent=5 // pred_region
        // Predicated region
        $region21: #{tpu_custom_call.1} parent=19 // pred_check
          %p411 = pneg %p66
        $region22: #{tpu_custom_call.1} parent=19 // pred_check_branch
          %413 = sbr.rel (%p411) target = $region24
        $region23: #{tpu_custom_call.1} parent=19 // pred_region
          %p414 = scmp.lt.s32.totalorder %s32, 1
          %s415 = scalar_select %p414, %s32, 1
          %p416 = scmp.lt.s32.totalorder %s33, 0
          %s417 = scalar_select %p416, %s33, 0
          %s418 = sadd.s32 %s417, %s415
          %s419 = smul.addr %s418, 8
          %s420 = scalar_lea.vmem %s0, %s419
        $region24: #{tpu_custom_call.1} parent=19 // pred_fallthru
          _
        // Predicated region
        $region25: #{tpu_custom_call.1} parent=19 // pred_check
          %p421 = pneg %p92
        $region26: #{tpu_custom_call.1} parent=19 // pred_check_branch
          %423 = sbr.rel (%p421) target = $region28
        $region27: #{tpu_custom_call.1} parent=19 // pred_region
          %p424 = scmp.lt.s32.totalorder %s32, 1
          %s425 = scalar_select %p424, %s32, 1
          %s426 = smul.addr %s425, 8
          %s427 = scalar_lea.vmem %s1, %s426
        $region28: #{tpu_custom_call.1} parent=19 // pred_fallthru
          _
        // Predicated region
        $region29: #{tpu_custom_call.1} parent=19 // pred_check
          %p428 = pneg %p118
        $region30: #{tpu_custom_call.1} parent=19 // pred_check_branch
          %430 = sbr.rel (%p428) target = $region32
        $region31: #{tpu_custom_call.1} parent=19 // pred_region
          %p431 = scmp.lt.s32.totalorder %s34, 3
          %s432 = scalar_select %p431, %s34, 3
          %s433 = smul.addr %s432, 4
          %s434 = smul.addr %s433, 8
          %s435 = scalar_lea.vmem %s2, %s434
        $region32: #{tpu_custom_call.1} parent=19 // pred_fallthru
          _
        // Predicated region
        $region33: #{tpu_custom_call.1} parent=19 // pred_check
          %p436 = pneg %p144
        $region34: #{tpu_custom_call.1} parent=19 // pred_check_branch
          %438 = sbr.rel (%p436) target = $region36
        $region35: #{tpu_custom_call.1} parent=19 // pred_region
          %p439 = scmp.lt.s32.totalorder %s34, 3
          %s440 = scalar_select %p439, %s34, 3
          %s441 = scalar_lea.vmem %s3, %s440
        $region36: #{tpu_custom_call.1} parent=19 // pred_fallthru
          _
        // Predicated region
        $region37: #{tpu_custom_call.1} parent=19 // pred_check
          %p442 = pneg %p170
        $region38: #{tpu_custom_call.1} parent=19 // pred_check_branch
          %444 = sbr.rel (%p442) target = $region40
        $region39: #{tpu_custom_call.1} parent=19 // pred_region
          %p445 = scmp.lt.s32.totalorder %s34, 3
          %s446 = scalar_select %p445, %s34, 3
          %s447 = smul.addr %s446, 4
          %s448 = smul.addr %s447, 8
          %s449 = scalar_lea.vmem %s4, %s448
        $region40: #{tpu_custom_call.1} parent=19 // pred_fallthru
          _
        // Predicated region
        $region41: #{tpu_custom_call.1} parent=19 // pred_check
          %p450 = pneg %p196
        $region42: #{tpu_custom_call.1} parent=19 // pred_check_branch
          %452 = sbr.rel (%p450) target = $region44
        $region43: #{tpu_custom_call.1} parent=19 // pred_region
          %p453 = scmp.lt.s32.totalorder %s34, 3
          %s454 = scalar_select %p453, %s34, 3
          %s455 = scalar_lea.vmem %s5, %s454
        $region44: #{tpu_custom_call.1} parent=19 // pred_fallthru
          _
        // Predicated region
        $region45: #{tpu_custom_call.1} parent=19 // pred_check
          %p456 = pneg %p222
        $region46: #{tpu_custom_call.1} parent=19 // pred_check_branch
          %458 = sbr.rel (%p456) target = $region48
        $region47: #{tpu_custom_call.1} parent=19 // pred_region
          %p459 = scmp.lt.s32.totalorder %s34, 3
          %s460 = scalar_select %p459, %s34, 3
          %s461 = smul.addr %s460, 4
          %s462 = smul.addr %s461, 8
          %s463 = scalar_lea.vmem %s6, %s462
        $region48: #{tpu_custom_call.1} parent=19 // pred_fallthru
          _
        // Predicated region
        $region49: #{tpu_custom_call.1} parent=19 // pred_check
          %p464 = pneg %p248
        $region50: #{tpu_custom_call.1} parent=19 // pred_check_branch
          %466 = sbr.rel (%p464) target = $region52
        $region51: #{tpu_custom_call.1} parent=19 // pred_region
          %p467 = scmp.lt.s32.totalorder %s34, 3
          %s468 = scalar_select %p467, %s34, 3
          %s469 = scalar_lea.vmem %s7, %s468
        $region52: #{tpu_custom_call.1} parent=19 // pred_fallthru
          _
        // Predicated region
        $region53: #{tpu_custom_call.1} parent=19 // pred_check
          %p470 = pneg %p278
        $region54: #{tpu_custom_call.1} parent=19 // pred_check_branch
          %472 = sbr.rel (%p470) target = $region56
        $region55: #{tpu_custom_call.1} parent=19 // pred_region
          %p473 = scmp.lt.s32.totalorder %s32, 1
          %s474 = scalar_select %p473, %s32, 1
          %p475 = scmp.lt.s32.totalorder %s34, 3
          %s476 = scalar_select %p475, %s34, 3
          %p477 = scmp.lt.s32.totalorder %s33, 0
          %s478 = scalar_select %p477, %s33, 0
          %s479 = sadd.s32 %s478, %s476
          %s480 = smul.addr %s474, 4
          %s481 = sadd.s32 %s479, %s480
          %s482 = smul.addr %s481, 8
          %s483 = scalar_lea.vmem %s8, %s482
        $region56: #{tpu_custom_call.1} parent=19 // pred_fallthru
          _
        // Predicated region
        $region57: #{tpu_custom_call.1} parent=19 // pred_check
          %p484 = pneg %p304
        $region58: #{tpu_custom_call.1} parent=19 // pred_check_branch
          %486 = sbr.rel (%p484) target = $region60
        $region59: #{tpu_custom_call.1} parent=19 // pred_region
          %p487 = scmp.lt.s32.totalorder %s34, 3
          %s488 = scalar_select %p487, %s34, 3
          %s489 = smul.addr %s488, 8
          %s490 = scalar_lea.vmem %s9, %s489
        $region60: #{tpu_custom_call.1} parent=19 // pred_fallthru
          _
      $region20: #{tpu_custom_call.1} parent=5 // pred_fallthru
        _
      %p491 = scmp.le.s32.totalorder 1, %s25
      %p492 = scmp.lt.s32.totalorder %s25, 9
      %p493 = pnand %p491, %p492
      %p494 = pneg %p493
      // Predicated region
      $region61: #{tpu_custom_call.1} parent=5 // pred_check
        _
      $region62: #{tpu_custom_call.1} parent=5 // pred_check_branch
        %496 = sbr.rel (%p493) target = $region64
      $region63: #{tpu_custom_call.1} parent=5 // pred_region
        %s497 = ssub.s32 %s25, 1
        %p498 = scmp.lt.s32.totalorder %s35, 1
        %s499 = scalar_select %p498, %s35, 1
        %p500 = scmp.lt.s32.totalorder %s36, 0
        %s501 = scalar_select %p500, %s36, 0
        %s502 = sadd.s32 %s501, %s499
        %s503 = smul.addr %s502, 8
        %s504 = scalar_lea.vmem %s0, %s503
        %p505 = pneg %p72
        %p506 = pneg %p69
        %p507 = scmp.lt.s32.totalorder %s35, 1
        %s508 = scalar_select %p507, %s35, 1
        %s509 = smul.addr %s508, 8
        %s510 = scalar_lea.vmem %s1, %s509
        %p511 = pneg %p98
        %p512 = pneg %p95
        %p513 = scmp.lt.s32.totalorder %s37, 3
        %s514 = scalar_select %p513, %s37, 3
        %s515 = smul.addr %s514, 4
        %s516 = smul.addr %s515, 8
        %s517 = scalar_lea.vmem %s2, %s516
        %p518 = pneg %p124
        %p519 = pneg %p121
        %p520 = scmp.lt.s32.totalorder %s37, 3
        %s521 = scalar_select %p520, %s37, 3
        %s522 = scalar_lea.vmem %s3, %s521
        %p523 = pneg %p150
        %p524 = pneg %p147
        %p525 = scmp.lt.s32.totalorder %s37, 3
        %s526 = scalar_select %p525, %s37, 3
        %s527 = smul.addr %s526, 4
        %s528 = smul.addr %s527, 8
        %s529 = scalar_lea.vmem %s4, %s528
        %p530 = pneg %p176
        %p531 = pneg %p173
        %p532 = scmp.lt.s32.totalorder %s37, 3
        %s533 = scalar_select %p532, %s37, 3
        %s534 = scalar_lea.vmem %s5, %s533
        %p535 = pneg %p202
        %p536 = pneg %p199
        %p537 = scmp.lt.s32.totalorder %s37, 3
        %s538 = scalar_select %p537, %s37, 3
        %s539 = smul.addr %s538, 4
        %s540 = smul.addr %s539, 8
        %s541 = scalar_lea.vmem %s6, %s540
        %p542 = pneg %p228
        %p543 = pneg %p225
        %p544 = scmp.lt.s32.totalorder %s37, 3
        %s545 = scalar_select %p544, %s37, 3
        %s546 = scalar_lea.vmem %s7, %s545
        %p547 = pneg %p254
        %p548 = pneg %p251
        %p549 = scmp.lt.s32.totalorder %s35, 1
        %s550 = scalar_select %p549, %s35, 1
        %p551 = scmp.lt.s32.totalorder %s37, 3
        %s552 = scalar_select %p551, %s37, 3
        %p553 = scmp.lt.s32.totalorder %s36, 0
        %s554 = scalar_select %p553, %s36, 0
        %s555 = sadd.s32 %s554, %s552
        %s556 = smul.addr %s550, 4
        %s557 = sadd.s32 %s555, %s556
        %s558 = smul.addr %s557, 8
        %s559 = scalar_lea.vmem %s8, %s558
        %p560 = pneg %p284
        %p561 = pneg %p281
        %p562 = scmp.lt.s32.totalorder %s37, 3
        %s563 = scalar_select %p562, %s37, 3
        %s564 = smul.addr %s563, 8
        %s565 = scalar_lea.vmem %s9, %s564
        %p566 = pneg %p310
        %p567 = pneg %p307
        %p568 = pneg %p331
        %p569 = pneg %p328
        %p570 = pneg %p359
        %p571 = pneg %p356
        %s572 = sand.u32 %s346, 1
        %s573 = scalar_lea.sflag [#allocation6], %s572
        %s574 = sand.u32 %s346, 1
        %s575 = smul.addr %s574, 8
        %s576 = scalar_lea.vmem [#allocation5], %s575
        %p577 = pneg %p389
        %p578 = pneg %p386
        %s579 = sand.u32 %s376, 1
        %s580 = scalar_lea.sflag [#allocation8], %s579
        %s581 = sand.u32 %s376, 1
        %s582 = smul.addr %s581, 8
        %s583 = scalar_lea.vmem [#allocation7], %s582
        %p584 = scmp.lt.s32.totalorder %s35, 1
        %s585 = scalar_select %p584, %s35, 1
        %p586 = scmp.lt.s32.totalorder %s36, 0
        %s587 = scalar_select %p586, %s36, 0
        %s588 = sadd.s32 %s587, %s585
        %s589 = smul.addr %s588, 8
        %s590 = scalar_lea.vmem %s0, %s589
        %p591 = scmp.lt.s32.totalorder %s35, 1
        %s592 = scalar_select %p591, %s35, 1
        %s593 = smul.addr %s592, 8
        %s594 = scalar_lea.vmem %s1, %s593
        %p595 = scmp.lt.s32.totalorder %s37, 3
        %s596 = scalar_select %p595, %s37, 3
        %s597 = smul.addr %s596, 4
        %s598 = smul.addr %s597, 8
        %s599 = scalar_lea.vmem %s2, %s598
        %p600 = scmp.lt.s32.totalorder %s37, 3
        %s601 = scalar_select %p600, %s37, 3
        %s602 = scalar_lea.vmem %s3, %s601
        %p603 = scmp.lt.s32.totalorder %s37, 3
        %s604 = scalar_select %p603, %s37, 3
        %s605 = smul.addr %s604, 4
        %s606 = smul.addr %s605, 8
        %s607 = scalar_lea.vmem %s4, %s606
        %p608 = scmp.lt.s32.totalorder %s37, 3
        %s609 = scalar_select %p608, %s37, 3
        %s610 = scalar_lea.vmem %s5, %s609
        %p611 = scmp.lt.s32.totalorder %s37, 3
        %s612 = scalar_select %p611, %s37, 3
        %s613 = smul.addr %s612, 4
        %s614 = smul.addr %s613, 8
        %s615 = scalar_lea.vmem %s6, %s614
        %p616 = scmp.lt.s32.totalorder %s37, 3
        %s617 = scalar_select %p616, %s37, 3
        %s618 = scalar_lea.vmem %s7, %s617
        %p619 = scmp.lt.s32.totalorder %s35, 1
        %s620 = scalar_select %p619, %s35, 1
        %p621 = scmp.lt.s32.totalorder %s37, 3
        %s622 = scalar_select %p621, %s37, 3
        %p623 = scmp.lt.s32.totalorder %s36, 0
        %s624 = scalar_select %p623, %s36, 0
        %s625 = sadd.s32 %s624, %s622
        %s626 = smul.addr %s620, 4
        %s627 = sadd.s32 %s625, %s626
        %s628 = smul.addr %s627, 8
        %s629 = scalar_lea.vmem %s8, %s628
        %p630 = scmp.lt.s32.totalorder %s37, 3
        %s631 = scalar_select %p630, %s37, 3
        %s632 = smul.addr %s631, 8
        %s633 = scalar_lea.vmem %s9, %s632
        %v634 = vld [vmem:[%s590] sm:$0xff]
        %p635 = scmp.eq.s32.totalorder %s36, 0
        // Predicated region
        $region65: #{tpu_custom_call.1} parent=63 // pred_check
          %p636 = pneg %p635
        $region66: #{tpu_custom_call.1} parent=63 // pred_check_branch
          %638 = sbr.rel (%p636) target = $region68
        $region67: #{tpu_custom_call.1} parent=63 // pred_region
          %v639 = vld [vmem:[%s594] sm:$0xff]
          %v640 = vld [vmem:[%s607] sm:$0xff]
          %v641 = vld [vmem:[%s607 + $0x8] sm:$0xff]
          %v642 = vld [vmem:[%s607 + $0x10] sm:$0xff]
          %v643 = vld [vmem:[%s607 + $0x18] sm:$0xff]
          %v644 = vld [vmem:[%s610] sm:$0x1]
          %v646 = vlaneseq
          %v647 = vshrl.u32 %v646, 7
          %v648 = vsub.s32 0, %v647
          %v649 = vrot.slane %v644, %v648
          %vm651 = vcmask 261120
          %v653 = vsel %vm651, %v639, 0
          %655 = vmatprep.subr.mxu0 0.0
          %656 = vmatpush1.msra.mxu0 %v640
          %657 = vmatprep.subr.mxu0 0.0
          %658 = vmatpush1.msra.mxu0 %v641
          %659 = vmatprep.subr.mxu0 0.0
          %660 = vmatpush1.msra.mxu0 %v642
          %661 = vmatprep.subr.mxu0 0.0
          %662 = vmatpush1.msra.mxu0 %v643
          %663 = vmatprep.subr.mxu0 0.0
          %664 = vmatpush1.msra.mxu0 0.0
          %665 = vmatprep.subr.mxu0 0.0
          %666 = vmatpush1.msra.mxu0 0.0
          %667 = vmatprep.subr.mxu0 0.0
          %668 = vmatpush1.msra.mxu0 0.0
          %669 = vmatprep.subr.mxu0 0.0
          %670 = vmatpush1.msra.mxu0 0.0
          %671 = vmatprep.subr.mxu0 0.0
          %672 = vmatpush1.msra.mxu0 0.0
          %673 = vmatprep.subr.mxu0 0.0
          %674 = vmatpush1.msra.mxu0 0.0
          %675 = vmatprep.subr.mxu0 0.0
          %676 = vmatpush1.msra.mxu0 0.0
          %677 = vmatprep.subr.mxu0 0.0
          %678 = vmatpush1.msra.mxu0 0.0
          %679 = vmatprep.subr.mxu0 0.0
          %680 = vmatpush1.msra.mxu0 0.0
          %681 = vmatprep.subr.mxu0 0.0
          %682 = vmatpush1.msra.mxu0 0.0
          %683 = vmatprep.subr.mxu0 0.0
          %684 = vmatpush1.msra.mxu0 0.0
          %685 = vmatprep.subr.mxu0 0.0
          %686 = vmatpush1.msra.mxu0 0.0
          %687 = vmatprep.subr.mxu0 0.0
          %688 = vmatpush1.msra.mxu0 0.0
          %689 = vmatprep.subr.mxu0 0.0
          %690 = vmatpush1.msra.mxu0 0.0
          %691 = vmatprep.subr.mxu0 0.0
          %692 = vmatpush1.msra.mxu0 0.0
          %693 = vmatprep.subr.mxu0 0.0
          %694 = vmatpush1.msra.mxu0 0.0
          %695 = vmatprep.subr.mxu0 0.0
          %696 = vmatpush1.msra.mxu0 0.0
          %697 = vmatprep.subr.mxu0 0.0
          %698 = vmatpush1.msra.mxu0 0.0
          %699 = vmatprep.subr.mxu0 0.0
          %700 = vmatpush1.msra.mxu0 0.0
          %701 = vmatprep.subr.mxu0 0.0
          %702 = vmatpush1.msra.mxu0 0.0
          %703 = vmatprep.subr.mxu0 0.0
          %704 = vmatpush1.msra.mxu0 0.0
          %705 = vmatprep.subr.mxu0 0.0
          %706 = vmatpush1.msra.mxu0 0.0
          %707 = vmatprep.subr.mxu0 0.0
          %708 = vmatpush1.msra.mxu0 0.0
          %709 = vmatprep.subr.mxu0 0.0
          %710 = vmatpush1.msra.mxu0 0.0
          %711 = vmatprep.subr.mxu0 0.0
          %712 = vmatpush1.msra.mxu0 0.0
          %713 = vmatprep.subr.mxu0 0.0
          %714 = vmatpush1.msra.mxu0 0.0
          %715 = vmatprep.subr.mxu0 0.0
          %716 = vmatpush1.msra.mxu0 0.0
          %717 = vmatprep.subr.mxu0 0.0
          %718 = vmatpush1.msra.mxu0 0.0
          %719 = vmatprep.mubr.f32.mxu0 0.0
          %720 = vmatmul.mubr.f32.gmra.mrb[0].mxu0 %v653
          %v721 = vpop.f32.mrb[0].mxu0
          %v722 = vadd.f32 %v649, %v721
          %v723 = vpop.f32.mrb[0].mxu0
          %724 = vdwg.mxu0
          %v725 = vld [vmem:[%s615] sm:$0xff]
          %v726 = vld [vmem:[%s615 + $0x8] sm:$0xff]
          %v727 = vld [vmem:[%s615 + $0x10] sm:$0xff]
          %v728 = vld [vmem:[%s615 + $0x18] sm:$0xff]
          %v729 = vld [vmem:[%s618] sm:$0x1]
          %v731 = vlaneseq
          %v732 = vshrl.u32 %v731, 7
          %v733 = vsub.s32 0, %v732
          %v734 = vrot.slane %v729, %v733
          %736 = vmatprep.subr.mxu0 0.0
          %737 = vmatpush1.msra.mxu0 %v725
          %738 = vmatprep.subr.mxu0 0.0
          %739 = vmatpush1.msra.mxu0 %v726
          %740 = vmatprep.subr.mxu0 0.0
          %741 = vmatpush1.msra.mxu0 %v727
          %742 = vmatprep.subr.mxu0 0.0
          %743 = vmatpush1.msra.mxu0 %v728
          %744 = vmatprep.subr.mxu0 0.0
          %745 = vmatpush1.msra.mxu0 0.0
          %746 = vmatprep.subr.mxu0 0.0
          %747 = vmatpush1.msra.mxu0 0.0
          %748 = vmatprep.subr.mxu0 0.0
          %749 = vmatpush1.msra.mxu0 0.0
          %750 = vmatprep.subr.mxu0 0.0
          %751 = vmatpush1.msra.mxu0 0.0
          %752 = vmatprep.subr.mxu0 0.0
          %753 = vmatpush1.msra.mxu0 0.0
          %754 = vmatprep.subr.mxu0 0.0
          %755 = vmatpush1.msra.mxu0 0.0
          %756 = vmatprep.subr.mxu0 0.0
          %757 = vmatpush1.msra.mxu0 0.0
          %758 = vmatprep.subr.mxu0 0.0
          %759 = vmatpush1.msra.mxu0 0.0
          %760 = vmatprep.subr.mxu0 0.0
          %761 = vmatpush1.msra.mxu0 0.0
          %762 = vmatprep.subr.mxu0 0.0
          %763 = vmatpush1.msra.mxu0 0.0
          %764 = vmatprep.subr.mxu0 0.0
          %765 = vmatpush1.msra.mxu0 0.0
          %766 = vmatprep.subr.mxu0 0.0
          %767 = vmatpush1.msra.mxu0 0.0
          %768 = vmatprep.subr.mxu0 0.0
          %769 = vmatpush1.msra.mxu0 0.0
          %770 = vmatprep.subr.mxu0 0.0
          %771 = vmatpush1.msra.mxu0 0.0
          %772 = vmatprep.subr.mxu0 0.0
          %773 = vmatpush1.msra.mxu0 0.0
          %774 = vmatprep.subr.mxu0 0.0
          %775 = vmatpush1.msra.mxu0 0.0
          %776 = vmatprep.subr.mxu0 0.0
          %777 = vmatpush1.msra.mxu0 0.0
          %778 = vmatprep.subr.mxu0 0.0
          %779 = vmatpush1.msra.mxu0 0.0
          %780 = vmatprep.subr.mxu0 0.0
          %781 = vmatpush1.msra.mxu0 0.0
          %782 = vmatprep.subr.mxu0 0.0
          %783 = vmatpush1.msra.mxu0 0.0
          %784 = vmatprep.subr.mxu0 0.0
          %785 = vmatpush1.msra.mxu0 0.0
          %786 = vmatprep.subr.mxu0 0.0
          %787 = vmatpush1.msra.mxu0 0.0
          %788 = vmatprep.subr.mxu0 0.0
          %789 = vmatpush1.msra.mxu0 0.0
          %790 = vmatprep.subr.mxu0 0.0
          %791 = vmatpush1.msra.mxu0 0.0
          %792 = vmatprep.subr.mxu0 0.0
          %793 = vmatpush1.msra.mxu0 0.0
          %794 = vmatprep.subr.mxu0 0.0
          %795 = vmatpush1.msra.mxu0 0.0
          %796 = vmatprep.subr.mxu0 0.0
          %797 = vmatpush1.msra.mxu0 0.0
          %798 = vmatprep.subr.mxu0 0.0
          %799 = vmatpush1.msra.mxu0 0.0
          %800 = vmatprep.mubr.f32.mxu0 0.0
          %801 = vmatmul.mubr.f32.gmra.mrb[0].mxu0 %v653
          %v802 = vpop.f32.mrb[0].mxu0
          %v803 = vadd.f32 %v734, %v802
          %v804 = vpop.f32.mrb[0].mxu0
          %805 = vdwg.mxu0
          %s806 = smul.u32 %s37, 8
          %s807 = scalar_lea.vmem [#allocation3], %s806
          %vm808 = vcmask 64512
          %809 = vst.msk [vmem:[%s807] sm:$0xff] %vm808, %v722
          %s810 = scalar_lea.vmem [#allocation4], %s806
          %811 = vst.msk [vmem:[%s810] sm:$0xff] %vm808, %v803
        $region68: #{tpu_custom_call.1} parent=63 // pred_fallthru
          _
        %s812 = smul.u32 %s37, 8
        %s813 = scalar_lea.vmem [#allocation3], %s812
        %v814 = vld [vmem:[%s813] sm:$0xff]
        %s815 = scalar_lea.vmem [#allocation4], %s812
        %v816 = vld [vmem:[%s815] sm:$0xff]
        %v817 = vld [vmem:[%s599] sm:$0xff]
        %v818 = vld [vmem:[%s599 + $0x8] sm:$0xff]
        %v819 = vld [vmem:[%s599 + $0x10] sm:$0xff]
        %v820 = vld [vmem:[%s599 + $0x18] sm:$0xff]
        %v821 = vld [vmem:[%s602] sm:$0x1]
        %v823 = vlaneseq
        %v824 = vshrl.u32 %v823, 7
        %v825 = vsub.s32 0, %v824
        %v826 = vrot.slane %v821, %v825
        %vm828 = vcmask 261120
        %v830 = vsel %vm828, %v634, 0
        %832 = vmatprep.subr.mxu0 0.0
        %833 = vmatpush1.msra.mxu0 %v817
        %834 = vmatprep.subr.mxu0 0.0
        %835 = vmatpush1.msra.mxu0 %v818
        %836 = vmatprep.subr.mxu0 0.0
        %837 = vmatpush1.msra.mxu0 %v819
        %838 = vmatprep.subr.mxu0 0.0
        %839 = vmatpush1.msra.mxu0 %v820
        %840 = vmatprep.subr.mxu0 0.0
        %841 = vmatpush1.msra.mxu0 0.0
        %842 = vmatprep.subr.mxu0 0.0
        %843 = vmatpush1.msra.mxu0 0.0
        %844 = vmatprep.subr.mxu0 0.0
        %845 = vmatpush1.msra.mxu0 0.0
        %846 = vmatprep.subr.mxu0 0.0
        %847 = vmatpush1.msra.mxu0 0.0
        %848 = vmatprep.subr.mxu0 0.0
        %849 = vmatpush1.msra.mxu0 0.0
        %850 = vmatprep.subr.mxu0 0.0
        %851 = vmatpush1.msra.mxu0 0.0
        %852 = vmatprep.subr.mxu0 0.0
        %853 = vmatpush1.msra.mxu0 0.0
        %854 = vmatprep.subr.mxu0 0.0
        %855 = vmatpush1.msra.mxu0 0.0
        %856 = vmatprep.subr.mxu0 0.0
        %857 = vmatpush1.msra.mxu0 0.0
        %858 = vmatprep.subr.mxu0 0.0
        %859 = vmatpush1.msra.mxu0 0.0
        %860 = vmatprep.subr.mxu0 0.0
        %861 = vmatpush1.msra.mxu0 0.0
        %862 = vmatprep.subr.mxu0 0.0
        %863 = vmatpush1.msra.mxu0 0.0
        %864 = vmatprep.subr.mxu0 0.0
        %865 = vmatpush1.msra.mxu0 0.0
        %866 = vmatprep.subr.mxu0 0.0
        %867 = vmatpush1.msra.mxu0 0.0
        %868 = vmatprep.subr.mxu0 0.0
        %869 = vmatpush1.msra.mxu0 0.0
        %870 = vmatprep.subr.mxu0 0.0
        %871 = vmatpush1.msra.mxu0 0.0
        %872 = vmatprep.subr.mxu0 0.0
        %873 = vmatpush1.msra.mxu0 0.0
        %874 = vmatprep.subr.mxu0 0.0
        %875 = vmatpush1.msra.mxu0 0.0
        %876 = vmatprep.subr.mxu0 0.0
        %877 = vmatpush1.msra.mxu0 0.0
        %878 = vmatprep.subr.mxu0 0.0
        %879 = vmatpush1.msra.mxu0 0.0
        %880 = vmatprep.subr.mxu0 0.0
        %881 = vmatpush1.msra.mxu0 0.0
        %882 = vmatprep.subr.mxu0 0.0
        %883 = vmatpush1.msra.mxu0 0.0
        %884 = vmatprep.subr.mxu0 0.0
        %885 = vmatpush1.msra.mxu0 0.0
        %886 = vmatprep.subr.mxu0 0.0
        %887 = vmatpush1.msra.mxu0 0.0
        %888 = vmatprep.subr.mxu0 0.0
        %889 = vmatpush1.msra.mxu0 0.0
        %890 = vmatprep.subr.mxu0 0.0
        %891 = vmatpush1.msra.mxu0 0.0
        %892 = vmatprep.subr.mxu0 0.0
        %893 = vmatpush1.msra.mxu0 0.0
        %894 = vmatprep.subr.mxu0 0.0
        %895 = vmatpush1.msra.mxu0 0.0
        %896 = vmatprep.mubr.f32.mxu0 0.0
        %897 = vmatmul.mubr.f32.gmra.mrb[0].mxu0 %v830
        %v898 = vpop.f32.mrb[0].mxu0
        %v899 = vadd.f32 %v826, %v898
        %v900 = vpop.f32.mrb[0].mxu0
        %901 = vdwg.mxu0
        %v902 = vmul.f32 %v899, 0.35355338
        %v903 = vld [vmem:[%s629] sm:$0xff]
        %vm904 = vcmask 64512
        %v906 = vsel %vm904, %v902, 0
        %v909 = vsel %vm904, %v814, 0
        %911 = vmatprep.subr.mxu0 0.0
        %912 = vmatpush1.xpose.msra.mxu0 %v909
        %913 = vmatprep.subr.mxu0 0.0
        %914 = vmatpush1.xpose.msra.mxu0 0.0
        %915 = vmatprep.subr.mxu0 0.0
        %916 = vmatpush1.xpose.msra.mxu0 0.0
        %917 = vmatprep.subr.mxu0 0.0
        %918 = vmatpush1.xpose.msra.mxu0 0.0
        %919 = vmatprep.subr.mxu0 0.0
        %920 = vmatpush1.xpose.msra.mxu0 0.0
        %921 = vmatprep.subr.mxu0 0.0
        %922 = vmatpush1.xpose.msra.mxu0 0.0
        %923 = vmatprep.subr.mxu0 0.0
        %924 = vmatpush1.xpose.msra.mxu0 0.0
        %925 = vmatprep.subr.mxu0 0.0
        %926 = vmatpush1.xpose.msra.mxu0 0.0
        %927 = vmatprep.subr.mxu0 0.0
        %928 = vmatpush1.xpose.msra.mxu0 0.0
        %929 = vmatprep.subr.mxu0 0.0
        %930 = vmatpush1.xpose.msra.mxu0 0.0
        %931 = vmatprep.subr.mxu0 0.0
        %932 = vmatpush1.xpose.msra.mxu0 0.0
        %933 = vmatprep.subr.mxu0 0.0
        %934 = vmatpush1.xpose.msra.mxu0 0.0
        %935 = vmatprep.subr.mxu0 0.0
        %936 = vmatpush1.xpose.msra.mxu0 0.0
        %937 = vmatprep.subr.mxu0 0.0
        %938 = vmatpush1.xpose.msra.mxu0 0.0
        %939 = vmatprep.subr.mxu0 0.0
        %940 = vmatpush1.xpose.msra.mxu0 0.0
        %941 = vmatprep.subr.mxu0 0.0
        %942 = vmatpush1.xpose.msra.mxu0 0.0
        %943 = vmatprep.subr.mxu0 0.0
        %944 = vmatpush1.xpose.msra.mxu0 0.0
        %945 = vmatprep.subr.mxu0 0.0
        %946 = vmatpush1.xpose.msra.mxu0 0.0
        %947 = vmatprep.subr.mxu0 0.0
        %948 = vmatpush1.xpose.msra.mxu0 0.0
        %949 = vmatprep.subr.mxu0 0.0
        %950 = vmatpush1.xpose.msra.mxu0 0.0
        %951 = vmatprep.subr.mxu0 0.0
        %952 = vmatpush1.xpose.msra.mxu0 0.0
        %953 = vmatprep.subr.mxu0 0.0
        %954 = vmatpush1.xpose.msra.mxu0 0.0
        %955 = vmatprep.subr.mxu0 0.0
        %956 = vmatpush1.xpose.msra.mxu0 0.0
        %957 = vmatprep.subr.mxu0 0.0
        %958 = vmatpush1.xpose.msra.mxu0 0.0
        %959 = vmatprep.subr.mxu0 0.0
        %960 = vmatpush1.xpose.msra.mxu0 0.0
        %961 = vmatprep.subr.mxu0 0.0
        %962 = vmatpush1.xpose.msra.mxu0 0.0
        %963 = vmatprep.subr.mxu0 0.0
        %964 = vmatpush1.xpose.msra.mxu0 0.0
        %965 = vmatprep.subr.mxu0 0.0
        %966 = vmatpush1.xpose.msra.mxu0 0.0
        %967 = vmatprep.subr.mxu0 0.0
        %968 = vmatpush1.xpose.msra.mxu0 0.0
        %969 = vmatprep.subr.mxu0 0.0
        %970 = vmatpush1.xpose.msra.mxu0 0.0
        %971 = vmatprep.subr.mxu0 0.0
        %972 = vmatpush1.xpose.msra.mxu0 0.0
        %973 = vmatprep.subr.mxu0 0.0
        %974 = vmatpush1.xpose.msra.mxu0 0.0
        %975 = vmatprep.mubr.f32.mxu0 0.0
        %976 = vmatmul.mubr.f32.gmra.mrb[0].mxu0 %v906
        %v977 = vpop.f32.mrb[0].mxu0
        %v978 = vadd.f32 %v903, %v977
        %v979 = vpop.f32.mrb[0].mxu0
        %980 = vdwg.mxu0
        %v981 = vsel %vm904, %v978, -inf
        %982 = vmax.xlane.f32.xlu0 %v981
        %v983 = vpop.xlane.xlu0 %982
        %v984 = vsub.f32 %v978, %v983
        %v985 = vmul.f32 %v984, 1.442695
        %v986 = vpow.pop %v985
        %v987 = vsel %vm904, %v986, 0.0
        %988 = vadd.xlane.f32.xlu0 %v987
        %v989 = vpop.xlane.xlu0 %988
        %v990 = vrcp.pop %v989
        %v991 = vmul.f32 %v989, %v990
        %v992 = vsub.f32 2.0, %v991
        %v993 = vmul.f32 %v990, %v992
        %v994 = vmul.f32 %v986, %v993
        %995 = vst.msk [vmem:[%s583] sm:$0xff] %vm904, %v994
        %v997 = vsel %vm904, %v994, 0
        %999 = vmatprep.subr.mxu0 0.0
        %1000 = vmatpush1.msra.mxu0 %v816
        %1001 = vmatprep.subr.mxu0 0.0
        %1002 = vmatpush1.msra.mxu0 0.0
        %1003 = vmatprep.subr.mxu0 0.0
        %1004 = vmatpush1.msra.mxu0 0.0
        %1005 = vmatprep.subr.mxu0 0.0
        %1006 = vmatpush1.msra.mxu0 0.0
        %1007 = vmatprep.subr.mxu0 0.0
        %1008 = vmatpush1.msra.mxu0 0.0
        %1009 = vmatprep.subr.mxu0 0.0
        %1010 = vmatpush1.msra.mxu0 0.0
        %1011 = vmatprep.subr.mxu0 0.0
        %1012 = vmatpush1.msra.mxu0 0.0
        %1013 = vmatprep.subr.mxu0 0.0
        %1014 = vmatpush1.msra.mxu0 0.0
        %1015 = vmatprep.subr.mxu0 0.0
        %1016 = vmatpush1.msra.mxu0 0.0
        %1017 = vmatprep.subr.mxu0 0.0
        %1018 = vmatpush1.msra.mxu0 0.0
        %1019 = vmatprep.subr.mxu0 0.0
        %1020 = vmatpush1.msra.mxu0 0.0
        %1021 = vmatprep.subr.mxu0 0.0
        %1022 = vmatpush1.msra.mxu0 0.0
        %1023 = vmatprep.subr.mxu0 0.0
        %1024 = vmatpush1.msra.mxu0 0.0
        %1025 = vmatprep.subr.mxu0 0.0
        %1026 = vmatpush1.msra.mxu0 0.0
        %1027 = vmatprep.subr.mxu0 0.0
        %1028 = vmatpush1.msra.mxu0 0.0
        %1029 = vmatprep.subr.mxu0 0.0
        %1030 = vmatpush1.msra.mxu0 0.0
        %1031 = vmatprep.subr.mxu0 0.0
        %1032 = vmatpush1.msra.mxu0 0.0
        %1033 = vmatprep.subr.mxu0 0.0
        %1034 = vmatpush1.msra.mxu0 0.0
        %1035 = vmatprep.subr.mxu0 0.0
        %1036 = vmatpush1.msra.mxu0 0.0
        %1037 = vmatprep.subr.mxu0 0.0
        %1038 = vmatpush1.msra.mxu0 0.0
        %1039 = vmatprep.subr.mxu0 0.0
        %1040 = vmatpush1.msra.mxu0 0.0
        %1041 = vmatprep.subr.mxu0 0.0
        %1042 = vmatpush1.msra.mxu0 0.0
        %1043 = vmatprep.subr.mxu0 0.0
        %1044 = vmatpush1.msra.mxu0 0.0
        %1045 = vmatprep.subr.mxu0 0.0
        %1046 = vmatpush1.msra.mxu0 0.0
        %1047 = vmatprep.subr.mxu0 0.0
        %1048 = vmatpush1.msra.mxu0 0.0
        %1049 = vmatprep.subr.mxu0 0.0
        %1050 = vmatpush1.msra.mxu0 0.0
        %1051 = vmatprep.subr.mxu0 0.0
        %1052 = vmatpush1.msra.mxu0 0.0
        %1053 = vmatprep.subr.mxu0 0.0
        %1054 = vmatpush1.msra.mxu0 0.0
        %1055 = vmatprep.subr.mxu0 0.0
        %1056 = vmatpush1.msra.mxu0 0.0
        %1057 = vmatprep.subr.mxu0 0.0
        %1058 = vmatpush1.msra.mxu0 0.0
        %1059 = vmatprep.subr.mxu0 0.0
        %1060 = vmatpush1.msra.mxu0 0.0
        %1061 = vmatprep.subr.mxu0 0.0
        %1062 = vmatpush1.msra.mxu0 0.0
        %1063 = vmatprep.mubr.f32.mxu0 0.0
        %1064 = vmatmul.mubr.f32.gmra.mrb[0].mxu0 %v997
        %v1065 = vpop.f32.mrb[0].mxu0
        %v1066 = vadd.f32 0.0, %v1065
        %v1067 = vpop.f32.mrb[0].mxu0
        %1068 = vdwg.mxu0
        %v1069 = vld [vmem:[%s633] sm:$0xff]
        %v1071 = vsel %vm904, %v1066, 0
        %1073 = vmatprep.subr.mxu0 0.0
        %1074 = vmatpush1.msra.mxu0 %v1069
        %1075 = vmatprep.subr.mxu0 0.0
        %1076 = vmatpush1.msra.mxu0 0.0
        %1077 = vmatprep.subr.mxu0 0.0
        %1078 = vmatpush1.msra.mxu0 0.0
        %1079 = vmatprep.subr.mxu0 0.0
        %1080 = vmatpush1.msra.mxu0 0.0
        %1081 = vmatprep.subr.mxu0 0.0
        %1082 = vmatpush1.msra.mxu0 0.0
        %1083 = vmatprep.subr.mxu0 0.0
        %1084 = vmatpush1.msra.mxu0 0.0
        %1085 = vmatprep.subr.mxu0 0.0
        %1086 = vmatpush1.msra.mxu0 0.0
        %1087 = vmatprep.subr.mxu0 0.0
        %1088 = vmatpush1.msra.mxu0 0.0
        %1089 = vmatprep.subr.mxu0 0.0
        %1090 = vmatpush1.msra.mxu0 0.0
        %1091 = vmatprep.subr.mxu0 0.0
        %1092 = vmatpush1.msra.mxu0 0.0
        %1093 = vmatprep.subr.mxu0 0.0
        %1094 = vmatpush1.msra.mxu0 0.0
        %1095 = vmatprep.subr.mxu0 0.0
        %1096 = vmatpush1.msra.mxu0 0.0
        %1097 = vmatprep.subr.mxu0 0.0
        %1098 = vmatpush1.msra.mxu0 0.0
        %1099 = vmatprep.subr.mxu0 0.0
        %1100 = vmatpush1.msra.mxu0 0.0
        %1101 = vmatprep.subr.mxu0 0.0
        %1102 = vmatpush1.msra.mxu0 0.0
        %1103 = vmatprep.subr.mxu0 0.0
        %1104 = vmatpush1.msra.mxu0 0.0
        %1105 = vmatprep.subr.mxu0 0.0
        %1106 = vmatpush1.msra.mxu0 0.0
        %1107 = vmatprep.subr.mxu0 0.0
        %1108 = vmatpush1.msra.mxu0 0.0
        %1109 = vmatprep.subr.mxu0 0.0
        %1110 = vmatpush1.msra.mxu0 0.0
        %1111 = vmatprep.subr.mxu0 0.0
        %1112 = vmatpush1.msra.mxu0 0.0
        %1113 = vmatprep.subr.mxu0 0.0
        %1114 = vmatpush1.msra.mxu0 0.0
        %1115 = vmatprep.subr.mxu0 0.0
        %1116 = vmatpush1.msra.mxu0 0.0
        %1117 = vmatprep.subr.mxu0 0.0
        %1118 = vmatpush1.msra.mxu0 0.0
        %1119 = vmatprep.subr.mxu0 0.0
        %1120 = vmatpush1.msra.mxu0 0.0
        %1121 = vmatprep.subr.mxu0 0.0
        %1122 = vmatpush1.msra.mxu0 0.0
        %1123 = vmatprep.subr.mxu0 0.0
        %1124 = vmatpush1.msra.mxu0 0.0
        %1125 = vmatprep.subr.mxu0 0.0
        %1126 = vmatpush1.msra.mxu0 0.0
        %1127 = vmatprep.subr.mxu0 0.0
        %1128 = vmatpush1.msra.mxu0 0.0
        %1129 = vmatprep.subr.mxu0 0.0
        %1130 = vmatpush1.msra.mxu0 0.0
        %1131 = vmatprep.subr.mxu0 0.0
        %1132 = vmatpush1.msra.mxu0 0.0
        %1133 = vmatprep.subr.mxu0 0.0
        %1134 = vmatpush1.msra.mxu0 0.0
        %1135 = vmatprep.subr.mxu0 0.0
        %1136 = vmatpush1.msra.mxu0 0.0
        %1137 = vmatprep.mubr.f32.mxu0 0.0
        %1138 = vmatmul.mubr.f32.gmra.mrb[0].mxu0 %v1071
        %v1139 = vpop.f32.mrb[0].mxu0
        %v1140 = vadd.f32 0.0, %v1139
        %v1141 = vpop.f32.mrb[0].mxu0
        %1142 = vdwg.mxu0
        %p1143 = scmp.eq.s32.totalorder %s37, 0
        // Predicated region
        $region69: #{tpu_custom_call.1} parent=63 // pred_check
          %p1144 = pneg %p1143
        $region70: #{tpu_custom_call.1} parent=63 // pred_check_branch
          %1146 = sbr.rel (%p1144) target = $region72
        $region71: #{tpu_custom_call.1} parent=63 // pred_region
          %v1147 = vld [vmem:[%s10] sm:$0x1]
          %v1149 = vlaneseq
          %v1150 = vshrl.u32 %v1149, 7
          %v1151 = vsub.s32 0, %v1150
          %v1152 = vrot.slane %v1147, %v1151
          %v1154 = vadd.f32 %v1140, %v1152
          %1155 = vst.msk [vmem:[#allocation2] sm:$0xff] %vm828, %v1154
        $region72: #{tpu_custom_call.1} parent=63 // pred_fallthru
          _
        %p1156 = scmp.gt.s32.totalorder %s37, 0
        // Predicated region
        $region73: #{tpu_custom_call.1} parent=63 // pred_check
          %p1157 = pneg %p1156
        $region74: #{tpu_custom_call.1} parent=63 // pred_check_branch
          %1159 = sbr.rel (%p1157) target = $region76
        $region75: #{tpu_custom_call.1} parent=63 // pred_region
          %v1160 = vld [vmem:[#allocation2] sm:$0xff]
          %v1161 = vadd.f32 %v1160, %v1140
          %1162 = vst.msk [vmem:[#allocation2] sm:$0xff] %vm828, %v1161
        $region76: #{tpu_custom_call.1} parent=63 // pred_fallthru
          _
        %p1163 = scmp.eq.s32.totalorder %s37, 3
        // Predicated region
        $region77: #{tpu_custom_call.1} parent=63 // pred_check
          %p1164 = pneg %p1163
        $region78: #{tpu_custom_call.1} parent=63 // pred_check_branch
          %1166 = sbr.rel (%p1164) target = $region80
        $region79: #{tpu_custom_call.1} parent=63 // pred_region
          %v1167 = vld [vmem:[#allocation2] sm:$0xff]
          %1168 = vst.msk [vmem:[%s576] sm:$0xff] %vm828, %v1167
        $region80: #{tpu_custom_call.1} parent=63 // pred_fallthru
          _
        %s1169 = sand.u32 %s346, 1
        %s1170 = scalar_lea.sflag [#allocation6], %s1169
        %s1171 = sand.u32 %s346, 1
        %s1172 = smul.addr %s1171, 8
        %s1173 = scalar_lea.vmem [#allocation5], %s1172
        %s1174 = sand.u32 %s376, 1
        %s1175 = scalar_lea.sflag [#allocation8], %s1174
        %s1176 = sand.u32 %s376, 1
        %s1177 = smul.addr %s1176, 8
        %s1178 = scalar_lea.vmem [#allocation7], %s1177
        // Predicated region
        $region81: #{tpu_custom_call.1} parent=63 // pred_check
          %p1179 = pneg %p356
        $region82: #{tpu_custom_call.1} parent=63 // pred_check_branch
          %1181 = sbr.rel (%p1179) target = $region84
        $region83: #{tpu_custom_call.1} parent=63 // pred_region
          %s1183 = ssub.s32 128, 128
          %1184 = vsyncadd %s1170, %s1183
          %s1185 = sadd.s32 %s36, %s35
          %s1186 = smul.addr %s1185, 128
          %s1187 = scalar_lea.hbm %s11, %s1186
          %s1189 = sshll.u32 %s1173, 4
          %s1190 = int_to_ptr.vmem [resolvable:$true] %s1189
          %1192 = dma.vmem_to_hbm [thread:$0]  %s1190, 128, %s1187, %s1170
        $region84: #{tpu_custom_call.1} parent=63 // pred_fallthru
          _
        // Predicated region
        $region85: #{tpu_custom_call.1} parent=63 // pred_check
          %p1193 = pneg %p386
        $region86: #{tpu_custom_call.1} parent=63 // pred_check_branch
          %1195 = sbr.rel (%p1193) target = $region88
        $region87: #{tpu_custom_call.1} parent=63 // pred_region
          %s1197 = ssub.s32 128, 128
          %1198 = vsyncadd %s1175, %s1197
          %s1199 = sadd.s32 %s36, %s37
          %s1200 = smul.addr %s35, 4
          %s1201 = sadd.s32 %s1199, %s1200
          %s1202 = smul.addr %s1201, 128
          %s1203 = scalar_lea.hbm %s12, %s1202
          %s1205 = sshll.u32 %s1178, 4
          %s1206 = int_to_ptr.vmem [resolvable:$true] %s1205
          %1208 = dma.vmem_to_hbm [thread:$0]  %s1206, 128, %s1203, %s1175
        $region88: #{tpu_custom_call.1} parent=63 // pred_fallthru
          _
      $region64: #{tpu_custom_call.1} parent=5 // pred_fallthru
        _
      %p1209 = scmp.le.s32.totalorder 2, %s25
      // Predicated region
      $region89: #{tpu_custom_call.1} parent=5 // pred_check
        %p1210 = pneg %p1209
      $region90: #{tpu_custom_call.1} parent=5 // pred_check_branch
        %1212 = sbr.rel (%p1210) target = $region92
      $region91: #{tpu_custom_call.1} parent=5 // pred_region
        %s1213 = ssub.s32 %s25, 2
        // Predicated region
        $region93: #{tpu_custom_call.1} parent=91 // pred_check
          %p1214 = pneg %p362
        $region94: #{tpu_custom_call.1} parent=91 // pred_check_branch
          %1216 = sbr.rel (%p1214) target = $region96
        $region95: #{tpu_custom_call.1} parent=91 // pred_region
          %s1217 = sand.u32 %s347, 1
          %s1218 = scalar_lea.sflag [#allocation6], %s1217
          %s1219 = sand.u32 %s347, 1
          %s1220 = smul.addr %s1219, 8
          %s1221 = scalar_lea.vmem [#allocation5], %s1220
          %1222 = dma.done %s1218, 128
        $region96: #{tpu_custom_call.1} parent=91 // pred_fallthru
          _
        // Predicated region
        $region97: #{tpu_custom_call.1} parent=91 // pred_check
          %p1223 = pneg %p392
        $region98: #{tpu_custom_call.1} parent=91 // pred_check_branch
          %1225 = sbr.rel (%p1223) target = $region100
        $region99: #{tpu_custom_call.1} parent=91 // pred_region
          %s1226 = sand.u32 %s377, 1
          %s1227 = scalar_lea.sflag [#allocation8], %s1226
          %s1228 = sand.u32 %s377, 1
          %s1229 = smul.addr %s1228, 8
          %s1230 = scalar_lea.vmem [#allocation7], %s1229
          %1231 = dma.done %s1227, 128
        $region100: #{tpu_custom_call.1} parent=91 // pred_fallthru
          _
      $region92: #{tpu_custom_call.1} parent=5 // pred_fallthru
        _
    $region6: #{tpu_custom_call.1} parent=1 // loop_footer
      %s29 = sadd.s32 1, %s25
    $region7: #{tpu_custom_call.1} parent=1 // loop_footer_branch
      %24 = sbr.rel target = $region3
    $region8: #{tpu_custom_call.1} parent=1 // loop_exit
      _
    %1232 = vsyncpa [#allocation6], 1
    %s1233 = scalar_lea.sflag [#allocation6], 1
    %1234 = vsyncpa %s1233, 1
    %1235 = vsyncpa [#allocation8], 1
    %s1236 = scalar_lea.sflag [#allocation8], 1
    %1237 = vsyncpa %s1236, 1

</llo_original>
